<compile_context>
chip_gen: v7x
topology: tpu7x:2x2x1
jax: 0.10.0
libtpu: 0.0.40
codegen_flags: <defaults>
</compile_context>

<pallas_src>
import functools
import math

import jax
import jax.numpy as jnp
from jax.experimental import pallas as pl
from jax.experimental.pallas import tpu as pltpu


# ------------------------------ Pallas kernel --------------------------------

def _block_kernel(x_ref,
                  ln1_w_ref, ln1_b_ref,
                  w_qkv_ref, b_qkv_ref,
                  w_proj_ref, b_proj_ref,
                  ln2_w_ref, ln2_b_ref,
                  w_fc_ref, b_fc_ref,
                  w_fc2_ref, b_fc2_ref,
                  o_ref,
                  *, gh: int, hd: int):
    f32, bf16 = jnp.float32, jnp.bfloat16

    x = x_ref[...]                         # (T, C) f32 -- batch dim is squeezed
    T, C = x.shape
    gw = gh * hd                           # lanes per head group
    n_groups = w_qkv_ref.shape[0]
    n_ff = w_fc_ref.shape[0]
    eps = 1e-5

    def layernorm(v, w, b):                # f32 VPU math
        mu = jnp.mean(v, axis=-1, keepdims=True)
        var = jnp.mean((v - mu) ** 2, axis=-1, keepdims=True)
        return (v - mu) * jax.lax.rsqrt(var + eps) * w + b

    def run_loop(n, body, init):
        # Single-step loops are inlined; longer loops use fori_loop so the
        # working set stays bounded to one iteration.
        if n == 1:
            return body(0, init)
        return jax.lax.fori_loop(0, n, body, init, unroll=(n <= 2))

    # ---------------- attention: loop over head groups -----------------------
    ln1 = layernorm(x, ln1_w_ref[...], ln1_b_ref[...]).astype(bf16)     # (T, C)

    def attn_group(g, acc):
        wg = w_qkv_ref[g]                              # (C, 3*gw) bf16
        bg = b_qkv_ref[g]                              # (1, 3*gw) f32
        # q columns already carry the 1/sqrt(hd) scale (folded host-side)
        qkv = jnp.dot(ln1, wg, preferred_element_type=f32) + bg         # (T, 3gw)

        # causal mask generated per group -- no persistent (T,T) f32 slab
        rows = jax.lax.broadcasted_iota(jnp.int32, (T, T), 0)
        cols = jax.lax.broadcasted_iota(jnp.int32, (T, T), 1)
        causal = cols <= rows

        # TODO(synk): flash-style KV tiling with an online softmax here for
        # long contexts (removes the (T,T) score buffer entirely).
        heads = []
        for j in range(gh):                            # small static unroll
            q = qkv[:, j * hd:(j + 1) * hd].astype(bf16)                # (T, hd)
            k = qkv[:, gw + j * hd: gw + (j + 1) * hd].astype(bf16)
            v = qkv[:, 2 * gw + j * hd: 2 * gw + (j + 1) * hd].astype(bf16)
            s = jax.lax.dot_general(q, k, (((1,), (1,)), ((), ())),
                                    preferred_element_type=f32)         # (T, T)
            s = jnp.where(causal, s, -1e30)
            s = s - jnp.max(s, axis=-1, keepdims=True)
            p = jnp.exp(s)
            l = jnp.sum(p, axis=-1, keepdims=True)                      # (T, 1)
            pv = jnp.dot(p.astype(bf16), v,
                         preferred_element_type=f32)                    # (T, hd)
            # normalize AFTER the PV matmul: T*hd mults instead of T*T
            pv = pv * pl.reciprocal(l, approx=True)
            heads.append(pv.astype(bf16))

        att_g = heads[0] if gh == 1 else jnp.concatenate(heads, axis=-1)  # (T, gw)
        wp = w_proj_ref[g]                              # (gw, C) bf16
        return acc + jnp.dot(att_g, wp, preferred_element_type=f32)

    y = run_loop(n_groups, attn_group, jnp.zeros((T, C), f32))
    x1 = x + y + b_proj_ref[...]                        # residual (+ c_proj bias once)

    # ---------------- MLP: loop over 4C hidden chunks -------------------------
    ln2 = layernorm(x1, ln2_w_ref[...], ln2_b_ref[...]).astype(bf16)
    c0 = math.sqrt(2.0 / math.pi)

    def mlp_chunk(c, acc):
        wf = w_fc_ref[c]                                # (C, ff_tile) bf16
        bf = b_fc_ref[c]                                # (1, ff_tile) f32
        h1 = jnp.dot(ln2, wf, preferred_element_type=f32) + bf          # (T, ff_tile)
        g = 0.5 * h1 * (1.0 + jnp.tanh(c0 * (h1 + 0.044715 * h1 * h1 * h1)))
        wf2 = w_fc2_ref[c]                              # (ff_tile, C) bf16
        return acc + jnp.dot(g.astype(bf16), wf2, preferred_element_type=f32)

    h2 = run_loop(n_ff, mlp_chunk, jnp.zeros((T, C), f32))
    o_ref[...] = x1 + h2 + b_fc2_ref[...]               # residual (+ c_proj bias once)


# ----------------------------- config helpers --------------------------------

def _pick_heads_per_group(n_head: int, hd: int) -> int:
    """Largest divisor of n_head with gh*hd ~ 128 lanes (capped at 8-way unroll)."""
    target = max(1, min(128 // max(hd, 1), 8))
    gh = 1
    for g in range(1, n_head + 1):
        if n_head % g == 0 and g <= target:
            gh = g
    return gh


def _pick_ff_tile(ffn: int) -> int:
    """Largest divisor of the 4C hidden size that is <= 512."""
    cap = 512
    if ffn <= cap:
        return ffn
    for t in range(cap, 0, -1):
        if ffn % t == 0:
            return t
    return 1


def _vmem_capacity_bytes() -> int:
    """Per-chip VMEM capacity (conservative v7x fallback if the query fails)."""
    try:
        info = pltpu.get_tpu_info()
        cap = getattr(info, "vmem_capacity_bytes", None)
        if cap:
            return int(cap)
    except Exception:  # hardware-capability probe only; never masks kernel errors
        pass
    return 64 * 2 ** 20


@functools.lru_cache(maxsize=None)
def _single_buffer_weights_supported() -> bool:
    """One-time cached feature probe for pl.BlockSpec(pipeline_mode=pl.Buffered(1))."""
    def _probe(x_ref, o_ref):
        o_ref[...] = x_ref[...] * 2.0

    try:
        fn = pl.pallas_call(
            _probe,
            out_shape=jax.ShapeDtypeStruct((8, 128), jnp.float32),
            grid=(2,),
            in_specs=[pl.BlockSpec((8, 128), lambda i: (0, 0),
                                   pipeline_mode=pl.Buffered(1))],
            out_specs=pl.BlockSpec((8, 128), lambda i: (0, 0)),
        )
        jax.block_until_ready(fn(jnp.ones((8, 128), jnp.float32)))
        return True
    except Exception:  # probe only -- the real kernel is never wrapped like this
        return False


# ------------------------------ builder (cached) ------------------------------

@functools.lru_cache(maxsize=None)
def _build_block_call(B, T, C, n_head, gh, ff_tile, single_buffer):
    f32 = jnp.float32
    hd = C // n_head
    gw = gh * hd
    ng = n_head // gh
    nf = (4 * C) // ff_tile

    def wspec(shape):
        idx = lambda b: (0,) * len(shape)       # constant block index across grid
        if single_buffer:
            return pl.BlockSpec(shape, idx, pipeline_mode=pl.Buffered(1))
        return pl.BlockSpec(shape, idx)

    in_specs = [
        pl.BlockSpec((pl.Squeezed(), T, C), lambda b: (b, 0, 0)),   # x: 1 batch/step
        wspec((1, C)), wspec((1, C)),                               # ln1
        wspec((ng, C, 3 * gw)), wspec((ng, 1, 3 * gw)),             # c_attn (grouped)
        wspec((ng, gw, C)), wspec((1, C)),                          # attn c_proj
        wspec((1, C)), wspec((1, C)),                               # ln2
        wspec((nf, C, ff_tile)), wspec((nf, 1, ff_tile)),           # c_fc (chunked)
        wspec((nf, ff_tile, C)), wspec((1, C)),                     # mlp c_proj
    ]

    # Working-set estimate -> scoped VMEM limit, clamped to this chip's VMEM.
    wbuf = 1 if single_buffer else 2
    wbytes = 2 * (3 * C * C + C * C + 4 * C * C + 4 * C * C)        # bf16 weights
    bbytes = 4 * (3 * C + 6 * C + 4 * C)                            # f32 biases/LN
    actbytes = (4 * 10 * T * C                                      # x/x1/y/h2/out/ln
                + 4 * 2 * T * T                                     # scores + probs
                + 4 * T * 3 * gw                                    # per-group qkv
                + 4 * 2 * T * ff_tile)                              # h1 + gelu
    est = int(1.4 * (wbuf * wbytes + bbytes + actbytes)) + (1 << 20)
    cap = _vmem_capacity_bytes()
    vmem_limit = int(min(max(est, 32 * 2 ** 20), int(0.9 * cap)))

    cost = pl.CostEstimate(
        flops=2 * B * T * (12 * C * C) + 4 * B * n_head * T * T * hd,
        transcendentals=B * (n_head * T * T + 4 * T * C),
        bytes_accessed=wbytes + bbytes + 2 * B * T * C * 4,
    )

    return pl.pallas_call(
        functools.partial(_block_kernel, gh=gh, hd=hd),
        out_shape=jax.ShapeDtypeStruct((B, T, C), f32),
        grid=(B,),
        in_specs=in_specs,
        out_specs=pl.BlockSpec((pl.Squeezed(), T, C), lambda b: (b, 0, 0)),
        compiler_params=pltpu.CompilerParams(
            dimension_semantics=("parallel",),
            vmem_limit_bytes=vmem_limit),
        cost_estimate=cost,
    )


# ------------------------------- host wrapper ---------------------------------

def _prep_params(params, C, n_head, gh, ff_tile):
    """Regroup weights per head-group / FF-chunk; fold 1/sqrt(hd) into Q."""
    f32, bf16 = jnp.float32, jnp.bfloat16
    hd = C // n_head
    gw = gh * hd
    ng = n_head // gh
    nf = (4 * C) // ff_tile
    scale = 1.0 / math.sqrt(hd)

    w_attn = params["w_attn"].astype(f32)                 # (C, 3C)
    b_attn = params["b_attn"].astype(f32)                 # (3C,)
    wq = (w_attn[:, :C] * scale).reshape(C, ng, gw)
    wk = w_attn[:, C:2 * C].reshape(C, ng, gw)
    wv = w_attn[:, 2 * C:].reshape(C, ng, gw)
    w_qkv = jnp.transpose(jnp.concatenate([wq, wk, wv], axis=-1),
                          (1, 0, 2)).astype(bf16)         # (ng, C, 3gw)
    bq = (b_attn[:C] * scale).reshape(ng, 1, gw)
    bk = b_attn[C:2 * C].reshape(ng, 1, gw)
    bv = b_attn[2 * C:].reshape(ng, 1, gw)
    b_qkv = jnp.concatenate([bq, bk, bv], axis=-1)        # (ng, 1, 3gw) f32

    return (
        params["ln1_w"].reshape(1, C).astype(f32),
        params["ln1_b"].reshape(1, C).astype(f32),
        w_qkv,
        b_qkv,
        params["w_proj"].reshape(ng, gw, C).astype(bf16),
        params["b_proj"].reshape(1, C).astype(f32),
        params["ln2_w"].reshape(1, C).astype(f32),
        params["ln2_b"].reshape(1, C).astype(f32),
        jnp.transpose(params["w_fc"].reshape(C, nf, ff_tile), (1, 0, 2)).astype(bf16),
        params["b_fc"].reshape(nf, 1, ff_tile).astype(f32),
        params["w_fc2"].reshape(nf, ff_tile, C).astype(bf16),
        params["b_fc2"].reshape(1, C).astype(f32),
    )


@functools.partial(jax.jit, static_argnames=("n_head", "single_buffer"))
def _forward(x, params, *, n_head, single_buffer):
    B, T, C = x.shape
    hd = C // n_head
    gh = _pick_heads_per_group(n_head, hd)
    ff_tile = _pick_ff_tile(4 * C)
    args = _prep_params(params, C, n_head, gh, ff_tile)
    call = _build_block_call(B, T, C, n_head, gh, ff_tile, single_buffer)
    return call(x.astype(jnp.float32), *args)


def gpt2_block_forward(x, params, n_head):
    """x: (B, T, C) float32. params: dict of Block parameters (f32)."""
    single_buffer = _single_buffer_weights_supported()   # eager, cached probe
    return _forward(x, params, n_head=n_head, single_buffer=single_buffer)


# ---------------------------- pure-JAX reference ------------------------------

def _reference_block(x, p, n_head):
    B, T, C = x.shape
    hd = C // n_head

    def ln(v, w, b):
        mu = jnp.mean(v, -1, keepdims=True)
        var = jnp.mean((v - mu) ** 2, -1, keepdims=True)
        return (v - mu) / jnp.sqrt(var + 1e-5) * w + b

    h = ln(x, p["ln1_w"], p["ln1_b"])
    qkv = h @ p["w_attn"] + p["b_attn"]
    q, k, v = jnp.split(qkv, 3, axis=-1)
    q = q.reshape(B, T, n_head, hd).transpose(0, 2, 1, 3)
    k = k.reshape(B, T, n_head, hd).transpose(0, 2, 1, 3)
    v = v.reshape(B, T, n_head, hd).transpose(0, 2, 1, 3)
    s = jnp.einsum("bhqd,bhkd->bhqk", q, k) / math.sqrt(hd)
    mask = jnp.tril(jnp.ones((T, T), bool))
    s = jnp.where(mask, s, -jnp.inf)
    a = jax.nn.softmax(s, axis=-1)
    y = jnp.einsum("bhqk,bhkd->bhqd", a, v).transpose(0, 2, 1, 3).reshape(B, T, C)
    x1 = x + (y @ p["w_proj"] + p["b_proj"])

    h2 = ln(x1, p["ln2_w"], p["ln2_b"]) @ p["w_fc"] + p["b_fc"]
    g = 0.5 * h2 * (1.0 + jnp.tanh(math.sqrt(2.0 / math.pi)
                                   * (h2 + 0.044715 * h2 ** 3)))
    return x1 + (g @ p["w_fc2"] + p["b_fc2"])


# ----------------------------------- main --------------------------------------

if __name__ == "__main__":
    B, T, C, n_head = 2, 8, 32, 4     # small GPT-2-style config

    key = jax.random.PRNGKey(0)
    keys = jax.random.split(key, 16)
    f32 = jnp.float32
    std = 0.02

    params = {
        "ln1_w": jnp.ones((C,), f32),
        "ln1_b": jnp.zeros((C,), f32),
        "w_attn": std * jax.random.normal(keys[1], (C, 3 * C), f32),
        "b_attn": std * jax.random.normal(keys[2], (3 * C,), f32),
        "w_proj": std * jax.random.normal(keys[3], (C, C), f32),
        "b_proj": std * jax.random.normal(keys[4], (C,), f32),
        "ln2_w": jnp.ones((C,), f32),
        "ln2_b": jnp.zeros((C,), f32),
        "w_fc": std * jax.random.normal(keys[5], (C, 4 * C), f32),
        "b_fc": std * jax.random.normal(keys[6], (4 * C,), f32),
        "w_fc2": std * jax.random.normal(keys[7], (4 * C, C), f32),
        "b_fc2": std * jax.random.normal(keys[8], (C,), f32),
    }

    x = jax.random.normal(keys[0], (B, T, C), f32)

    out = gpt2_block_forward(x, params, n_head)
    out = jax.block_until_ready(out)

    ref = _reference_block(x, params, n_head)
    assert out.shape == (B, T, C)
    err = jnp.max(jnp.abs(out - ref))
    # bf16 matmul operands (f32 accumulation) vs. the full-f32 reference
    assert jnp.allclose(out, ref, atol=2e-2, rtol=2e-2), f"max abs err {err}"

    print("KERNEL_OK")
</pallas_src>

<mosaic_0001>
module attributes {stable_mosaic.version = 11 : i64} {
  func.func @_probe(%arg0: i32, %arg1: memref<8x128xf32, #tpu.memory_space<vmem>>, %arg2: memref<8x128xf32, #tpu.memory_space<vmem>>) attributes {dimension_semantics = [#tpu.dimension_semantics<arbitrary>], iteration_bounds = array<i64: 2>, scalar_prefetch = 0 : i64, scratch_operands = 0 : i64, tpu.core_type = #tpu.core_type<tc>, window_params = [{pipeline_mode = #tpu.pipeline_mode<synchronous>, transform_indices = @transform_0, window_bounds = array<i64: 8, 128>}, {pipeline_mode = #tpu.pipeline_mode<synchronous>, transform_indices = @transform_1, window_bounds = array<i64: 8, 128>}]} {
    %c0 = arith.constant 0 : index
    %c0_0 = arith.constant 0 : index
    %0 = vector.load %arg1[%c0, %c0_0] : memref<8x128xf32, #tpu.memory_space<vmem>>, vector<8x128xf32>
    %cst = arith.constant 2.000000e+00 : f32
    %1 = vector.broadcast %cst : f32 to vector<8x128xf32>
    %2 = arith.mulf %0, %1 : vector<8x128xf32>
    %c0_1 = arith.constant 0 : index
    %c0_2 = arith.constant 0 : index
    %3 = vector.load %arg2[%c0_1, %c0_2] : memref<8x128xf32, #tpu.memory_space<vmem>>, vector<8x128xf32>
    tpu.vector_store %arg2[%c0_1, %c0_2], %2 {strides = array<i32>} : memref<8x128xf32, #tpu.memory_space<vmem>>, vector<8x128xf32>,
    return
  }
  func.func @transform_0(%arg0: i32) -> (i32, i32) {
    %c0_i32 = arith.constant 0 : i32
    %c0_i32_0 = arith.constant 0 : i32
    %c0_i32_1 = arith.constant 0 : i32
    return %c0_i32, %c0_i32_0 : i32, i32
  }
  func.func @transform_1(%arg0: i32) -> (i32, i32) {
    %c0_i32 = arith.constant 0 : i32
    %c0_i32_0 = arith.constant 0 : i32
    %c0_i32_1 = arith.constant 0 : i32
    return %c0_i32, %c0_i32_0 : i32, i32
  }
}

module attributes {stable_mosaic.version = 11 : i64} {
  func.func @_block_kernel(%arg0: i32, %arg1: memref<1x8x32xf32, #tpu.memory_space<vmem>>, %arg2: memref<1x32xf32, #tpu.memory_space<vmem>>, %arg3: memref<1x32xf32, #tpu.memory_space<vmem>>, %arg4: memref<1x32x96xbf16, #tpu.memory_space<vmem>>, %arg5: memref<1x1x96xf32, #tpu.memory_space<vmem>>, %arg6: memref<1x32x32xbf16, #tpu.memory_space<vmem>>, %arg7: memref<1x32xf32, #tpu.memory_space<vmem>>, %arg8: memref<1x32xf32, #tpu.memory_space<vmem>>, %arg9: memref<1x32xf32, #tpu.memory_space<vmem>>, %arg10: memref<1x32x128xbf16, #tpu.memory_space<vmem>>, %arg11: memref<1x1x128xf32, #tpu.memory_space<vmem>>, %arg12: memref<1x128x32xbf16, #tpu.memory_space<vmem>>, %arg13: memref<1x32xf32, #tpu.memory_space<vmem>>, %arg14: memref<1x8x32xf32, #tpu.memory_space<vmem>>) attributes {dimension_semantics = [#tpu.dimension_semantics<parallel>], iteration_bounds = array<i64: 2>, scalar_prefetch = 0 : i64, scratch_operands = 0 : i64, tpu.core_type = #tpu.core_type<tc>, window_params = [{transform_indices = @transform_0, window_bounds = array<i64: 1, 8, 32>}, {pipeline_mode = #tpu.pipeline_mode<synchronous>, transform_indices = @transform_1, window_bounds = array<i64: 1, 32>}, {pipeline_mode = #tpu.pipeline_mode<synchronous>, transform_indices = @transform_2, window_bounds = array<i64: 1, 32>}, {pipeline_mode = #tpu.pipeline_mode<synchronous>, transform_indices = @transform_3, window_bounds = array<i64: 1, 32, 96>}, {pipeline_mode = #tpu.pipeline_mode<synchronous>, transform_indices = @transform_4, window_bounds = array<i64: 1, 1, 96>}, {pipeline_mode = #tpu.pipeline_mode<synchronous>, transform_indices = @transform_5, window_bounds = array<i64: 1, 32, 32>}, {pipeline_mode = #tpu.pipeline_mode<synchronous>, transform_indices = @transform_6, window_bounds = array<i64: 1, 32>}, {pipeline_mode = #tpu.pipeline_mode<synchronous>, transform_indices = @transform_7, window_bounds = array<i64: 1, 32>}, {pipeline_mode = #tpu.pipeline_mode<synchronous>, transform_indices = @transform_8, window_bounds = array<i64: 1, 32>}, {pipeline_mode = #tpu.pipeline_mode<synchronous>, transform_indices = @transform_9, window_bounds = array<i64: 1, 32, 128>}, {pipeline_mode = #tpu.pipeline_mode<synchronous>, transform_indices = @transform_10, window_bounds = array<i64: 1, 1, 128>}, {pipeline_mode = #tpu.pipeline_mode<synchronous>, transform_indices = @transform_11, window_bounds = array<i64: 1, 128, 32>}, {pipeline_mode = #tpu.pipeline_mode<synchronous>, transform_indices = @transform_12, window_bounds = array<i64: 1, 32>}, {transform_indices = @transform_13, window_bounds = array<i64: 1, 8, 32>}]} {
    %c0 = arith.constant 0 : index
    %c0_0 = arith.constant 0 : index
    %c0_1 = arith.constant 0 : index
    %0 = vector.load %arg1[%c0, %c0_0, %c0_1] : memref<1x8x32xf32, #tpu.memory_space<vmem>>, vector<1x8x32xf32>
    %1 = vector.shape_cast %0 : vector<1x8x32xf32> to vector<8x32xf32>
    %c0_2 = arith.constant 0 : index
    %c0_3 = arith.constant 0 : index
    %2 = vector.load %arg2[%c0_2, %c0_3] : memref<1x32xf32, #tpu.memory_space<vmem>>, vector<1x32xf32>
    %c0_4 = arith.constant 0 : index
    %c0_5 = arith.constant 0 : index
    %3 = vector.load %arg3[%c0_4, %c0_5] : memref<1x32xf32, #tpu.memory_space<vmem>>, vector<1x32xf32>
    %cst = arith.constant dense<0.000000e+00> : vector<8xf32>
    %4 = vector.multi_reduction <add>, %1, %cst [1] : vector<8x32xf32> to vector<8xf32>
    %5 = vector.shape_cast %4 : vector<8xf32> to vector<8x1xf32>
    %cst_6 = arith.constant 3.200000e+01 : f32
    %6 = vector.broadcast %cst_6 : f32 to vector<8x1xf32>
    %7 = arith.divf %5, %6 : vector<8x1xf32>
    %8 = vector.broadcast %7 : vector<8x1xf32> to vector<8x32xf32>
    %9 = arith.subf %1, %8 : vector<8x32xf32>
    %10 = arith.mulf %9, %9 : vector<8x32xf32>
    %cst_7 = arith.constant dense<0.000000e+00> : vector<8xf32>
    %11 = vector.multi_reduction <add>, %10, %cst_7 [1] : vector<8x32xf32> to vector<8xf32>
    %12 = vector.shape_cast %11 : vector<8xf32> to vector<8x1xf32>
    %cst_8 = arith.constant 3.200000e+01 : f32
    %13 = vector.broadcast %cst_8 : f32 to vector<8x1xf32>
    %14 = arith.divf %12, %13 : vector<8x1xf32>
    %15 = vector.broadcast %7 : vector<8x1xf32> to vector<8x32xf32>
    %16 = arith.subf %1, %15 : vector<8x32xf32>
    %cst_9 = arith.constant 9.99999974E-6 : f32
    %17 = vector.broadcast %cst_9 : f32 to vector<8x1xf32>
    %18 = arith.addf %14, %17 : vector<8x1xf32>
    %19 = math.rsqrt %18 : vector<8x1xf32>
    %20 = vector.broadcast %19 : vector<8x1xf32> to vector<8x32xf32>
    %21 = arith.mulf %16, %20 : vector<8x32xf32>
    %22 = vector.broadcast %2 : vector<1x32xf32> to vector<8x32xf32>
    %23 = arith.mulf %21, %22 : vector<8x32xf32>
    %24 = vector.broadcast %3 : vector<1x32xf32> to vector<8x32xf32>
    %25 = arith.addf %23, %24 : vector<8x32xf32>
    %26 = arith.truncf %25 : vector<8x32xf32> to vector<8x32xbf16>
    %cst_10 = arith.constant 0.000000e+00 : f32
    %27 = vector.broadcast %cst_10 : f32 to vector<8x32xf32>
    %c0_11 = arith.constant 0 : index
    %c0_12 = arith.constant 0 : index
    %c0_13 = arith.constant 0 : index
    %28 = vector.load %arg4[%c0_11, %c0_12, %c0_13] : memref<1x32x96xbf16, #tpu.memory_space<vmem>>, vector<1x32x96xbf16>
    %29 = vector.shape_cast %28 : vector<1x32x96xbf16> to vector<32x96xbf16>
    %c0_14 = arith.constant 0 : index
    %c0_15 = arith.constant 0 : index
    %c0_16 = arith.constant 0 : index
    %30 = vector.load %arg5[%c0_14, %c0_15, %c0_16] : memref<1x1x96xf32, #tpu.memory_space<vmem>>, vector<1x1x96xf32>
    %31 = vector.shape_cast %30 : vector<1x1x96xf32> to vector<1x96xf32>
    %cst_17 = arith.constant dense<0.000000e+00> : vector<8x96xf32>
    %32 = tpu.matmul %26, %29, %cst_17 {dimension_numbers = #tpu.dot_dimension_numbers<[1], [0], [0], [1], [0, 0, 1, 1], [], []>} : vector<8x32xbf16>, vector<32x96xbf16>, vector<8x96xf32> -> vector<8x96xf32>
    %33 = vector.broadcast %31 : vector<1x96xf32> to vector<8x96xf32>
    %34 = arith.addf %32, %33 : vector<8x96xf32>
    %35 = tpu.iota {dimensions = array<i32: 0>} : vector<8x8xi32>
    %36 = tpu.iota {dimensions = array<i32: 1>} : vector<8x8xi32>
    %37 = arith.cmpi sle, %36, %35 : vector<8x8xi32>
    %38 = vector.extract_strided_slice %34 {offsets = [0, 0], sizes = [8, 8], strides = [1, 1]} : vector<8x96xf32> to vector<8x8xf32>
    %39 = arith.truncf %38 : vector<8x8xf32> to vector<8x8xbf16>
    %40 = vector.extract_strided_slice %34 {offsets = [0, 32], sizes = [8, 8], strides = [1, 1]} : vector<8x96xf32> to vector<8x8xf32>
    %41 = arith.truncf %40 : vector<8x8xf32> to vector<8x8xbf16>
    %42 = vector.extract_strided_slice %34 {offsets = [0, 64], sizes = [8, 8], strides = [1, 1]} : vector<8x96xf32> to vector<8x8xf32>
    %43 = arith.truncf %42 : vector<8x8xf32> to vector<8x8xbf16>
    %cst_18 = arith.constant dense<0.000000e+00> : vector<8x8xf32>
    %44 = tpu.matmul %39, %41, %cst_18 {dimension_numbers = #tpu.dot_dimension_numbers<[1], [1], [0], [0], [0, 0, 1, 0], [], []>} : vector<8x8xbf16>, vector<8x8xbf16>, vector<8x8xf32> -> vector<8x8xf32>
    %cst_19 = arith.constant -1.000000e+30 : f32
    %45 = vector.broadcast %cst_19 : f32 to vector<8x8xf32>
    %46 = arith.select %37, %44, %45 : vector<8x8xi1>, vector<8x8xf32>
    %cst_20 = arith.constant dense<0xFF800000> : vector<8xf32>
    %47 = vector.multi_reduction <maximumf>, %46, %cst_20 [1] : vector<8x8xf32> to vector<8xf32>
    %48 = vector.shape_cast %47 : vector<8xf32> to vector<8x1xf32>
    %49 = vector.broadcast %48 : vector<8x1xf32> to vector<8x8xf32>
    %50 = arith.subf %46, %49 : vector<8x8xf32>
    %51 = math.exp %50 : vector<8x8xf32>
    %cst_21 = arith.constant dense<0.000000e+00> : vector<8xf32>
    %52 = vector.multi_reduction <add>, %51, %cst_21 [1] : vector<8x8xf32> to vector<8xf32>
    %53 = vector.shape_cast %52 : vector<8xf32> to vector<8x1xf32>
    %54 = arith.truncf %51 : vector<8x8xf32> to vector<8x8xbf16>
    %cst_22 = arith.constant dense<0.000000e+00> : vector<8x8xf32>
    %55 = tpu.matmul %54, %43, %cst_22 {dimension_numbers = #tpu.dot_dimension_numbers<[1], [0], [0], [1], [0, 0, 1, 1], [], []>} : vector<8x8xbf16>, vector<8x8xbf16>, vector<8x8xf32> -> vector<8x8xf32>
    %56 = tpu.reciprocal %53 {approx = true} : vector<8x1xf32> -> vector<8x1xf32>
    %57 = vector.broadcast %56 : vector<8x1xf32> to vector<8x8xf32>
    %58 = arith.mulf %55, %57 : vector<8x8xf32>
    %59 = arith.truncf %58 : vector<8x8xf32> to vector<8x8xbf16>
    %60 = vector.extract_strided_slice %34 {offsets = [0, 8], sizes = [8, 8], strides = [1, 1]} : vector<8x96xf32> to vector<8x8xf32>
    %61 = arith.truncf %60 : vector<8x8xf32> to vector<8x8xbf16>
    %62 = vector.extract_strided_slice %34 {offsets = [0, 40], sizes = [8, 8], strides = [1, 1]} : vector<8x96xf32> to vector<8x8xf32>
    %63 = arith.truncf %62 : vector<8x8xf32> to vector<8x8xbf16>
    %64 = vector.extract_strided_slice %34 {offsets = [0, 72], sizes = [8, 8], strides = [1, 1]} : vector<8x96xf32> to vector<8x8xf32>
    %65 = arith.truncf %64 : vector<8x8xf32> to vector<8x8xbf16>
    %cst_23 = arith.constant dense<0.000000e+00> : vector<8x8xf32>
    %66 = tpu.matmul %61, %63, %cst_23 {dimension_numbers = #tpu.dot_dimension_numbers<[1], [1], [0], [0], [0, 0, 1, 0], [], []>} : vector<8x8xbf16>, vector<8x8xbf16>, vector<8x8xf32> -> vector<8x8xf32>
    %cst_24 = arith.constant -1.000000e+30 : f32
    %67 = vector.broadcast %cst_24 : f32 to vector<8x8xf32>
    %68 = arith.select %37, %66, %67 : vector<8x8xi1>, vector<8x8xf32>
    %cst_25 = arith.constant dense<0xFF800000> : vector<8xf32>
    %69 = vector.multi_reduction <maximumf>, %68, %cst_25 [1] : vector<8x8xf32> to vector<8xf32>
    %70 = vector.shape_cast %69 : vector<8xf32> to vector<8x1xf32>
    %71 = vector.broadcast %70 : vector<8x1xf32> to vector<8x8xf32>
    %72 = arith.subf %68, %71 : vector<8x8xf32>
    %73 = math.exp %72 : vector<8x8xf32>
    %cst_26 = arith.constant dense<0.000000e+00> : vector<8xf32>
    %74 = vector.multi_reduction <add>, %73, %cst_26 [1] : vector<8x8xf32> to vector<8xf32>
    %75 = vector.shape_cast %74 : vector<8xf32> to vector<8x1xf32>
    %76 = arith.truncf %73 : vector<8x8xf32> to vector<8x8xbf16>
    %cst_27 = arith.constant dense<0.000000e+00> : vector<8x8xf32>
    %77 = tpu.matmul %76, %65, %cst_27 {dimension_numbers = #tpu.dot_dimension_numbers<[1], [0], [0], [1], [0, 0, 1, 1], [], []>} : vector<8x8xbf16>, vector<8x8xbf16>, vector<8x8xf32> -> vector<8x8xf32>
    %78 = tpu.reciprocal %75 {approx = true} : vector<8x1xf32> -> vector<8x1xf32>
    %79 = vector.broadcast %78 : vector<8x1xf32> to vector<8x8xf32>
    %80 = arith.mulf %77, %79 : vector<8x8xf32>
    %81 = arith.truncf %80 : vector<8x8xf32> to vector<8x8xbf16>
    %82 = vector.extract_strided_slice %34 {offsets = [0, 16], sizes = [8, 8], strides = [1, 1]} : vector<8x96xf32> to vector<8x8xf32>
    %83 = arith.truncf %82 : vector<8x8xf32> to vector<8x8xbf16>
    %84 = vector.extract_strided_slice %34 {offsets = [0, 48], sizes = [8, 8], strides = [1, 1]} : vector<8x96xf32> to vector<8x8xf32>
    %85 = arith.truncf %84 : vector<8x8xf32> to vector<8x8xbf16>
    %86 = vector.extract_strided_slice %34 {offsets = [0, 80], sizes = [8, 8], strides = [1, 1]} : vector<8x96xf32> to vector<8x8xf32>
    %87 = arith.truncf %86 : vector<8x8xf32> to vector<8x8xbf16>
    %cst_28 = arith.constant dense<0.000000e+00> : vector<8x8xf32>
    %88 = tpu.matmul %83, %85, %cst_28 {dimension_numbers = #tpu.dot_dimension_numbers<[1], [1], [0], [0], [0, 0, 1, 0], [], []>} : vector<8x8xbf16>, vector<8x8xbf16>, vector<8x8xf32> -> vector<8x8xf32>
    %cst_29 = arith.constant -1.000000e+30 : f32
    %89 = vector.broadcast %cst_29 : f32 to vector<8x8xf32>
    %90 = arith.select %37, %88, %89 : vector<8x8xi1>, vector<8x8xf32>
    %cst_30 = arith.constant dense<0xFF800000> : vector<8xf32>
    %91 = vector.multi_reduction <maximumf>, %90, %cst_30 [1] : vector<8x8xf32> to vector<8xf32>
    %92 = vector.shape_cast %91 : vector<8xf32> to vector<8x1xf32>
    %93 = vector.broadcast %92 : vector<8x1xf32> to vector<8x8xf32>
    %94 = arith.subf %90, %93 : vector<8x8xf32>
    %95 = math.exp %94 : vector<8x8xf32>
    %cst_31 = arith.constant dense<0.000000e+00> : vector<8xf32>
    %96 = vector.multi_reduction <add>, %95, %cst_31 [1] : vector<8x8xf32> to vector<8xf32>
    %97 = vector.shape_cast %96 : vector<8xf32> to vector<8x1xf32>
    %98 = arith.truncf %95 : vector<8x8xf32> to vector<8x8xbf16>
    %cst_32 = arith.constant dense<0.000000e+00> : vector<8x8xf32>
    %99 = tpu.matmul %98, %87, %cst_32 {dimension_numbers = #tpu.dot_dimension_numbers<[1], [0], [0], [1], [0, 0, 1, 1], [], []>} : vector<8x8xbf16>, vector<8x8xbf16>, vector<8x8xf32> -> vector<8x8xf32>
    %100 = tpu.reciprocal %97 {approx = true} : vector<8x1xf32> -> vector<8x1xf32>
    %101 = vector.broadcast %100 : vector<8x1xf32> to vector<8x8xf32>
    %102 = arith.mulf %99, %101 : vector<8x8xf32>
    %103 = arith.truncf %102 : vector<8x8xf32> to vector<8x8xbf16>
    %104 = vector.extract_strided_slice %34 {offsets = [0, 24], sizes = [8, 8], strides = [1, 1]} : vector<8x96xf32> to vector<8x8xf32>
    %105 = arith.truncf %104 : vector<8x8xf32> to vector<8x8xbf16>
    %106 = vector.extract_strided_slice %34 {offsets = [0, 56], sizes = [8, 8], strides = [1, 1]} : vector<8x96xf32> to vector<8x8xf32>
    %107 = arith.truncf %106 : vector<8x8xf32> to vector<8x8xbf16>
    %108 = vector.extract_strided_slice %34 {offsets = [0, 88], sizes = [8, 8], strides = [1, 1]} : vector<8x96xf32> to vector<8x8xf32>
    %109 = arith.truncf %108 : vector<8x8xf32> to vector<8x8xbf16>
    %cst_33 = arith.constant dense<0.000000e+00> : vector<8x8xf32>
    %110 = tpu.matmul %105, %107, %cst_33 {dimension_numbers = #tpu.dot_dimension_numbers<[1], [1], [0], [0], [0, 0, 1, 0], [], []>} : vector<8x8xbf16>, vector<8x8xbf16>, vector<8x8xf32> -> vector<8x8xf32>
    %cst_34 = arith.constant -1.000000e+30 : f32
    %111 = vector.broadcast %cst_34 : f32 to vector<8x8xf32>
    %112 = arith.select %37, %110, %111 : vector<8x8xi1>, vector<8x8xf32>
    %cst_35 = arith.constant dense<0xFF800000> : vector<8xf32>
    %113 = vector.multi_reduction <maximumf>, %112, %cst_35 [1] : vector<8x8xf32> to vector<8xf32>
    %114 = vector.shape_cast %113 : vector<8xf32> to vector<8x1xf32>
    %115 = vector.broadcast %114 : vector<8x1xf32> to vector<8x8xf32>
    %116 = arith.subf %112, %115 : vector<8x8xf32>
    %117 = math.exp %116 : vector<8x8xf32>
    %cst_36 = arith.constant dense<0.000000e+00> : vector<8xf32>
    %118 = vector.multi_reduction <add>, %117, %cst_36 [1] : vector<8x8xf32> to vector<8xf32>
    %119 = vector.shape_cast %118 : vector<8xf32> to vector<8x1xf32>
    %120 = arith.truncf %117 : vector<8x8xf32> to vector<8x8xbf16>
    %cst_37 = arith.constant dense<0.000000e+00> : vector<8x8xf32>
    %121 = tpu.matmul %120, %109, %cst_37 {dimension_numbers = #tpu.dot_dimension_numbers<[1], [0], [0], [1], [0, 0, 1, 1], [], []>} : vector<8x8xbf16>, vector<8x8xbf16>, vector<8x8xf32> -> vector<8x8xf32>
    %122 = tpu.reciprocal %119 {approx = true} : vector<8x1xf32> -> vector<8x1xf32>
    %123 = vector.broadcast %122 : vector<8x1xf32> to vector<8x8xf32>
    %124 = arith.mulf %121, %123 : vector<8x8xf32>
    %125 = arith.truncf %124 : vector<8x8xf32> to vector<8x8xbf16>
    %126 = tpu.concatenate %59, %81, %103, %125 in 1 : vector<8x8xbf16>, vector<8x8xbf16>, vector<8x8xbf16>, vector<8x8xbf16> -> vector<8x32xbf16>
    %c0_38 = arith.constant 0 : index
    %c0_39 = arith.constant 0 : index
    %c0_40 = arith.constant 0 : index
    %127 = vector.load %arg6[%c0_38, %c0_39, %c0_40] : memref<1x32x32xbf16, #tpu.memory_space<vmem>>, vector<1x32x32xbf16>
    %128 = vector.shape_cast %127 : vector<1x32x32xbf16> to vector<32x32xbf16>
    %cst_41 = arith.constant dense<0.000000e+00> : vector<8x32xf32>
    %129 = tpu.matmul %126, %128, %cst_41 {dimension_numbers = #tpu.dot_dimension_numbers<[1], [0], [0], [1], [0, 0, 1, 1], [], []>} : vector<8x32xbf16>, vector<32x32xbf16>, vector<8x32xf32> -> vector<8x32xf32>
    %130 = arith.addf %27, %129 : vector<8x32xf32>
    %131 = arith.addf %1, %130 : vector<8x32xf32>
    %c0_42 = arith.constant 0 : index
    %c0_43 = arith.constant 0 : index
    %132 = vector.load %arg7[%c0_42, %c0_43] : memref<1x32xf32, #tpu.memory_space<vmem>>, vector<1x32xf32>
    %133 = vector.broadcast %132 : vector<1x32xf32> to vector<8x32xf32>
    %134 = arith.addf %131, %133 : vector<8x32xf32>
    %c0_44 = arith.constant 0 : index
    %c0_45 = arith.constant 0 : index
    %135 = vector.load %arg8[%c0_44, %c0_45] : memref<1x32xf32, #tpu.memory_space<vmem>>, vector<1x32xf32>
    %c0_46 = arith.constant 0 : index
    %c0_47 = arith.constant 0 : index
    %136 = vector.load %arg9[%c0_46, %c0_47] : memref<1x32xf32, #tpu.memory_space<vmem>>, vector<1x32xf32>
    %cst_48 = arith.constant dense<0.000000e+00> : vector<8xf32>
    %137 = vector.multi_reduction <add>, %134, %cst_48 [1] : vector<8x32xf32> to vector<8xf32>
    %138 = vector.shape_cast %137 : vector<8xf32> to vector<8x1xf32>
    %cst_49 = arith.constant 3.200000e+01 : f32
    %139 = vector.broadcast %cst_49 : f32 to vector<8x1xf32>
    %140 = arith.divf %138, %139 : vector<8x1xf32>
    %141 = vector.broadcast %140 : vector<8x1xf32> to vector<8x32xf32>
    %142 = arith.subf %134, %141 : vector<8x32xf32>
    %143 = arith.mulf %142, %142 : vector<8x32xf32>
    %cst_50 = arith.constant dense<0.000000e+00> : vector<8xf32>
    %144 = vector.multi_reduction <add>, %143, %cst_50 [1] : vector<8x32xf32> to vector<8xf32>
    %145 = vector.shape_cast %144 : vector<8xf32> to vector<8x1xf32>
    %cst_51 = arith.constant 3.200000e+01 : f32
    %146 = vector.broadcast %cst_51 : f32 to vector<8x1xf32>
    %147 = arith.divf %145, %146 : vector<8x1xf32>
    %148 = vector.broadcast %140 : vector<8x1xf32> to vector<8x32xf32>
    %149 = arith.subf %134, %148 : vector<8x32xf32>
    %cst_52 = arith.constant 9.99999974E-6 : f32
    %150 = vector.broadcast %cst_52 : f32 to vector<8x1xf32>
    %151 = arith.addf %147, %150 : vector<8x1xf32>
    %152 = math.rsqrt %151 : vector<8x1xf32>
    %153 = vector.broadcast %152 : vector<8x1xf32> to vector<8x32xf32>
    %154 = arith.mulf %149, %153 : vector<8x32xf32>
    %155 = vector.broadcast %135 : vector<1x32xf32> to vector<8x32xf32>
    %156 = arith.mulf %154, %155 : vector<8x32xf32>
    %157 = vector.broadcast %136 : vector<1x32xf32> to vector<8x32xf32>
    %158 = arith.addf %156, %157 : vector<8x32xf32>
    %159 = arith.truncf %158 : vector<8x32xf32> to vector<8x32xbf16>
    %cst_53 = arith.constant 0.000000e+00 : f32
    %160 = vector.broadcast %cst_53 : f32 to vector<8x32xf32>
    %c0_54 = arith.constant 0 : index
    %c0_55 = arith.constant 0 : index
    %c0_56 = arith.constant 0 : index
    %161 = vector.load %arg10[%c0_54, %c0_55, %c0_56] : memref<1x32x128xbf16, #tpu.memory_space<vmem>>, vector<1x32x128xbf16>
    %162 = vector.shape_cast %161 : vector<1x32x128xbf16> to vector<32x128xbf16>
    %c0_57 = arith.constant 0 : index
    %c0_58 = arith.constant 0 : index
    %c0_59 = arith.constant 0 : index
    %163 = vector.load %arg11[%c0_57, %c0_58, %c0_59] : memref<1x1x128xf32, #tpu.memory_space<vmem>>, vector<1x1x128xf32>
    %164 = vector.shape_cast %163 : vector<1x1x128xf32> to vector<1x128xf32>
    %cst_60 = arith.constant dense<0.000000e+00> : vector<8x128xf32>
    %165 = tpu.matmul %159, %162, %cst_60 {dimension_numbers = #tpu.dot_dimension_numbers<[1], [0], [0], [1], [0, 0, 1, 1], [], []>} : vector<8x32xbf16>, vector<32x128xbf16>, vector<8x128xf32> -> vector<8x128xf32>
    %166 = vector.broadcast %164 : vector<1x128xf32> to vector<8x128xf32>
    %167 = arith.addf %165, %166 : vector<8x128xf32>
    %cst_61 = arith.constant 5.000000e-01 : f32
    %168 = vector.broadcast %cst_61 : f32 to vector<8x128xf32>
    %169 = arith.mulf %168, %167 : vector<8x128xf32>
    %cst_62 = arith.constant 4.471500e-02 : f32
    %170 = vector.broadcast %cst_62 : f32 to vector<8x128xf32>
    %171 = arith.mulf %170, %167 : vector<8x128xf32>
    %172 = arith.mulf %171, %167 : vector<8x128xf32>
    %173 = arith.mulf %172, %167 : vector<8x128xf32>
    %174 = arith.addf %167, %173 : vector<8x128xf32>
    %cst_63 = arith.constant 0.797884583 : f32
    %175 = vector.broadcast %cst_63 : f32 to vector<8x128xf32>
    %176 = arith.mulf %175, %174 : vector<8x128xf32>
    %177 = math.tanh %176 : vector<8x128xf32>
    %cst_64 = arith.constant 1.000000e+00 : f32
    %178 = vector.broadcast %cst_64 : f32 to vector<8x128xf32>
    %179 = arith.addf %178, %177 : vector<8x128xf32>
    %180 = arith.mulf %169, %179 : vector<8x128xf32>
    %c0_65 = arith.constant 0 : index
    %c0_66 = arith.constant 0 : index
    %c0_67 = arith.constant 0 : index
    %181 = vector.load %arg12[%c0_65, %c0_66, %c0_67] : memref<1x128x32xbf16, #tpu.memory_space<vmem>>, vector<1x128x32xbf16>
    %182 = vector.shape_cast %181 : vector<1x128x32xbf16> to vector<128x32xbf16>
    %183 = arith.truncf %180 : vector<8x128xf32> to vector<8x128xbf16>
    %cst_68 = arith.constant dense<0.000000e+00> : vector<8x32xf32>
    %184 = tpu.matmul %183, %182, %cst_68 {dimension_numbers = #tpu.dot_dimension_numbers<[1], [0], [0], [1], [0, 0, 1, 1], [], []>} : vector<8x128xbf16>, vector<128x32xbf16>, vector<8x32xf32> -> vector<8x32xf32>
    %185 = arith.addf %160, %184 : vector<8x32xf32>
    %186 = arith.addf %134, %185 : vector<8x32xf32>
    %c0_69 = arith.constant 0 : index
    %c0_70 = arith.constant 0 : index
    %187 = vector.load %arg13[%c0_69, %c0_70] : memref<1x32xf32, #tpu.memory_space<vmem>>, vector<1x32xf32>
    %188 = vector.broadcast %187 : vector<1x32xf32> to vector<8x32xf32>
    %189 = arith.addf %186, %188 : vector<8x32xf32>
    %c0_71 = arith.constant 0 : index
    %c0_72 = arith.constant 0 : index
    %c0_73 = arith.constant 0 : index
    %190 = vector.load %arg14[%c0_71, %c0_72, %c0_73] : memref<1x8x32xf32, #tpu.memory_space<vmem>>, vector<1x8x32xf32>
    %191 = vector.shape_cast %190 : vector<1x8x32xf32> to vector<8x32xf32>
    %192 = vector.shape_cast %189 : vector<8x32xf32> to vector<1x8x32xf32>
    tpu.vector_store %arg14[%c0_71, %c0_72, %c0_73], %192 {strides = array<i32>} : memref<1x8x32xf32, #tpu.memory_space<vmem>>, vector<1x8x32xf32>,
    return
  }
  func.func @transform_0(%arg0: i32) -> (i32, i32, i32) {
    %c0_i32 = arith.constant 0 : i32
    %c0_i32_0 = arith.constant 0 : i32
    %c0_i32_1 = arith.constant 0 : i32
    return %arg0, %c0_i32, %c0_i32_0 : i32, i32, i32
  }
  func.func @transform_1(%arg0: i32) -> (i32, i32) {
    %c0_i32 = arith.constant 0 : i32
    %c0_i32_0 = arith.constant 0 : i32
    %c0_i32_1 = arith.constant 0 : i32
    return %c0_i32, %c0_i32_0 : i32, i32
  }
  func.func @transform_2(%arg0: i32) -> (i32, i32) {
    %c0_i32 = arith.constant 0 : i32
    %c0_i32_0 = arith.constant 0 : i32
    %c0_i32_1 = arith.constant 0 : i32
    return %c0_i32, %c0_i32_0 : i32, i32
  }
  func.func @transform_3(%arg0: i32) -> (i32, i32, i32) {
    %c0_i32 = arith.constant 0 : i32
    %c0_i32_0 = arith.constant 0 : i32
    %c0_i32_1 = arith.constant 0 : i32
    %c0_i32_2 = arith.constant 0 : i32
    return %c0_i32, %c0_i32_0, %c0_i32_1 : i32, i32, i32
  }
  func.func @transform_4(%arg0: i32) -> (i32, i32, i32) {
    %c0_i32 = arith.constant 0 : i32
    %c0_i32_0 = arith.constant 0 : i32
    %c0_i32_1 = arith.constant 0 : i32
    %c0_i32_2 = arith.constant 0 : i32
    return %c0_i32, %c0_i32_0, %c0_i32_1 : i32, i32, i32
  }
  func.func @transform_5(%arg0: i32) -> (i32, i32, i32) {
    %c0_i32 = arith.constant 0 : i32
    %c0_i32_0 = arith.constant 0 : i32
    %c0_i32_1 = arith.constant 0 : i32
    %c0_i32_2 = arith.constant 0 : i32
    return %c0_i32, %c0_i32_0, %c0_i32_1 : i32, i32, i32
  }
  func.func @transform_6(%arg0: i32) -> (i32, i32) {
    %c0_i32 = arith.constant 0 : i32
    %c0_i32_0 = arith.constant 0 : i32
    %c0_i32_1 = arith.constant 0 : i32
    return %c0_i32, %c0_i32_0 : i32, i32
  }
  func.func @transform_7(%arg0: i32) -> (i32, i32) {
    %c0_i32 = arith.constant 0 : i32
    %c0_i32_0 = arith.constant 0 : i32
    %c0_i32_1 = arith.constant 0 : i32
    return %c0_i32, %c0_i32_0 : i32, i32
  }
  func.func @transform_8(%arg0: i32) -> (i32, i32) {
    %c0_i32 = arith.constant 0 : i32
    %c0_i32_0 = arith.constant 0 : i32
    %c0_i32_1 = arith.constant 0 : i32
    return %c0_i32, %c0_i32_0 : i32, i32
  }
  func.func @transform_9(%arg0: i32) -> (i32, i32, i32) {
    %c0_i32 = arith.constant 0 : i32
    %c0_i32_0 = arith.constant 0 : i32
    %c0_i32_1 = arith.constant 0 : i32
    %c0_i32_2 = arith.constant 0 : i32
    return %c0_i32, %c0_i32_0, %c0_i32_1 : i32, i32, i32
  }
  func.func @transform_10(%arg0: i32) -> (i32, i32, i32) {
    %c0_i32 = arith.constant 0 : i32
    %c0_i32_0 = arith.constant 0 : i32
    %c0_i32_1 = arith.constant 0 : i32
    %c0_i32_2 = arith.constant 0 : i32
    return %c0_i32, %c0_i32_0, %c0_i32_1 : i32, i32, i32
  }
  func.func @transform_11(%arg0: i32) -> (i32, i32, i32) {
    %c0_i32 = arith.constant 0 : i32
    %c0_i32_0 = arith.constant 0 : i32
    %c0_i32_1 = arith.constant 0 : i32
    %c0_i32_2 = arith.constant 0 : i32
    return %c0_i32, %c0_i32_0, %c0_i32_1 : i32, i32, i32
  }
  func.func @transform_12(%arg0: i32) -> (i32, i32) {
    %c0_i32 = arith.constant 0 : i32
    %c0_i32_0 = arith.constant 0 : i32
    %c0_i32_1 = arith.constant 0 : i32
    return %c0_i32, %c0_i32_0 : i32, i32
  }
  func.func @transform_13(%arg0: i32) -> (i32, i32, i32) {
    %c0_i32 = arith.constant 0 : i32
    %c0_i32_0 = arith.constant 0 : i32
    %c0_i32_1 = arith.constant 0 : i32
    return %arg0, %c0_i32, %c0_i32_0 : i32, i32, i32
  }
}

</mosaic_0001>

<llo_original>
// kernel: tpu_custom_call.1
$region0: #{tpu_custom_call.1}
  #allocation0 [shape = 'u32[]', space=smem, size = 0x4, offset = 0x4, fixed_abs, tag = 'smem constant byte address 0x4 - core index']
  #allocation1 [shape = 'u32[144,128]{1,0:T(1,128)}', space=vmem, size = 0x12000, scoped, tag = 'internal scratch']
  %s0 = inlined_call_operand.hbm [shape: f32[8,128], index: 0, kind: input, shape index: {}]
  %s1 = inlined_call_operand.hbm [shape: f32[8,128], index: 1, kind: output, shape index: {}]
  %s2 = sld [smem:[#allocation0]]
  $region41: #{tpu_custom_call.1} parent=0
    _
  %s4 = ssub.s32 1, %s2
  %s5 = scalar_select 0, %s4, %s2
  $region1: #{tpu_custom_call.1} parent=0
    #allocation2 [shape = 'u8[4096]{0}', space=vmem, size = 0x1000, scoped, tag = 'input window, operand 0, single buffered']
    #allocation3 [shape = 's32[2]{0}', space=sflag, size = 0x8, scoped, tag = 'scoped memory for tpu_custom_call.1']
    #allocation4 [shape = 's32[2]{0}', space=sflag, size = 0x8, scoped, tag = 'scoped memory for tpu_custom_call.1']
    #allocation5 [shape = 'u8[4096]{0}', space=vmem, size = 0x1000, scoped, tag = 'output window, operand 0, single buffered']
    %6 = vsyncpa [#allocation3], 0
    %7 = vsyncpa [#allocation4], 0
    loop: start=0, step=1, limit=4
    $region2: #{tpu_custom_call.1} parent=1 // loop_pre_header
      _
    $region3: #{tpu_custom_call.1} parent=1 // loop_header
      %s9 = sphi 0, %s13
      %p10 = scmp.ge.s32.totalorder %s9, 4
      %s17 = sphi 0, %s17
      %s19 = sphi 0, %s17
      %s20 = sphi 0, %s19
      %s34 = sphi 0, %s20
      %s38 = sphi 0, %s38
      %s40 = sphi 0, %s38
      %s41 = sphi 0, %s40
      %s55 = sphi 0, %s41
    $region4: #{tpu_custom_call.1} parent=1 // loop_header_branch
      %12 = sbr.rel (%p10) target = $region8
    $region5: #{tpu_custom_call.1} parent=1 // loop_body
      %s14 = ssub.s32 %s9, 1
      %s15 = ssub.s32 %s9, 2
      %s16 = sadd.s32 %s9, 1
      %s18 = sadd.s32 %s17, 1
      %p21 = scmp.eq.s32.totalorder %s9, 1
      %p22 = scmp.ne.s32.totalorder %s17, %s19
      %p23 = scmp.eq.s32.totalorder %s9, 0
      %p24 = por %p22, %p23
      %p25 = scmp.ne.s32.totalorder %s17, %s19
      %p26 = scmp.eq.s32.totalorder %s14, 1
      %p27 = por %p25, %p26
      %p28 = scmp.ne.s32.totalorder %s19, %s20
      %p29 = scmp.eq.s32.totalorder %s14, 0
      %p30 = por %p28, %p29
      %p31 = scmp.ne.s32.totalorder %s19, %s20
      %p32 = scmp.eq.s32.totalorder %s15, 1
      %p33 = por %p31, %p32
      %p35 = scmp.ne.s32.totalorder %s20, %s34
      %p36 = scmp.eq.s32.totalorder %s15, 0
      %p37 = por %p35, %p36
      %s39 = sadd.s32 %s38, 1
      %p42 = scmp.eq.s32.totalorder %s9, 1
      %p43 = scmp.ne.s32.totalorder %s38, %s40
      %p44 = scmp.eq.s32.totalorder %s9, 0
      %p45 = por %p43, %p44
      %p46 = scmp.ne.s32.totalorder %s38, %s40
      %p47 = scmp.eq.s32.totalorder %s14, 1
      %p48 = por %p46, %p47
      %p49 = scmp.ne.s32.totalorder %s40, %s41
      %p50 = scmp.eq.s32.totalorder %s14, 0
      %p51 = por %p49, %p50
      %p52 = scmp.ne.s32.totalorder %s40, %s41
      %p53 = scmp.eq.s32.totalorder %s15, 1
      %p54 = por %p52, %p53
      %p56 = scmp.ne.s32.totalorder %s41, %s55
      %p57 = scmp.eq.s32.totalorder %s15, 0
      %p58 = por %p56, %p57
      %p59 = scmp.le.s32.totalorder 1, %s9
      %p60 = scmp.lt.s32.totalorder %s9, 3
      %p61 = pnand %p59, %p60
      %p62 = pneg %p61
      // Predicated region
      $region9: #{tpu_custom_call.1} parent=5 // pred_check
        _
      $region10: #{tpu_custom_call.1} parent=5 // pred_check_branch
        %64 = sbr.rel (%p61) target = $region12
      $region11: #{tpu_custom_call.1} parent=5 // pred_region
        %s65 = ssub.s32 %s9, 1
        // Predicated region
        $region13: #{tpu_custom_call.1} parent=11 // pred_check
          %p66 = pneg %p30
        $region14: #{tpu_custom_call.1} parent=11 // pred_check_branch
          %68 = sbr.rel (%p66) target = $region16
        $region15: #{tpu_custom_call.1} parent=11 // pred_region
          %s70 = ssub.s32 128, 128
          %71 = vsyncadd [#allocation3], %s70
          %s73 = sshll.u32 [#allocation2], 4
          %s74 = int_to_ptr.vmem [resolvable:$true] %s73
          %76 = dma.hbm_to_vmem [thread:$0]  %s0, 128, %s74, [#allocation3]
        $region16: #{tpu_custom_call.1} parent=11 // pred_fallthru
          _
      $region12: #{tpu_custom_call.1} parent=5 // pred_fallthru
        _
      %p77 = scmp.lt.s32.totalorder %s9, 2
      // Predicated region
      $region17: #{tpu_custom_call.1} parent=5 // pred_check
        %p78 = pneg %p77
      $region18: #{tpu_custom_call.1} parent=5 // pred_check_branch
        %80 = sbr.rel (%p78) target = $region20
      $region19: #{tpu_custom_call.1} parent=5 // pred_region
        _
      $region20: #{tpu_custom_call.1} parent=5 // pred_fallthru
        _
      %p81 = scmp.le.s32.totalorder 1, %s9
      %p82 = scmp.lt.s32.totalorder %s9, 3
      %p83 = pnand %p81, %p82
      %p84 = pneg %p83
      // Predicated region
      $region21: #{tpu_custom_call.1} parent=5 // pred_check
        _
      $region22: #{tpu_custom_call.1} parent=5 // pred_check_branch
        %86 = sbr.rel (%p83) target = $region24
      $region23: #{tpu_custom_call.1} parent=5 // pred_region
        %s87 = ssub.s32 %s9, 1
        // Predicated region
        $region25: #{tpu_custom_call.1} parent=23 // pred_check
          %p88 = pneg %p30
        $region26: #{tpu_custom_call.1} parent=23 // pred_check_branch
          %90 = sbr.rel (%p88) target = $region28
        $region27: #{tpu_custom_call.1} parent=23 // pred_region
          %91 = dma.done [#allocation3], 128
        $region28: #{tpu_custom_call.1} parent=23 // pred_fallthru
          _
        %p92 = pneg %p30
        %p93 = pneg %p27
        %p94 = pneg %p51
        %p95 = pneg %p48
        %v96 = vld [vmem:[#allocation2] sm:$0xff]
        %v97 = vmul.f32 %v96, 2.0
        %98 = vst [vmem:[#allocation5] sm:$0xff] %v97
        // Predicated region
        $region29: #{tpu_custom_call.1} parent=23 // pred_check
          %p99 = pneg %p48
        $region30: #{tpu_custom_call.1} parent=23 // pred_check_branch
          %101 = sbr.rel (%p99) target = $region32
        $region31: #{tpu_custom_call.1} parent=23 // pred_region
          %s103 = ssub.s32 128, 128
          %104 = vsyncadd [#allocation4], %s103
          %s106 = sshll.u32 [#allocation5], 4
          %s107 = int_to_ptr.vmem [resolvable:$true] %s106
          %109 = dma.vmem_to_hbm [thread:$0]  %s107, 128, %s1, [#allocation4]
        $region32: #{tpu_custom_call.1} parent=23 // pred_fallthru
          _
        // Predicated region
        $region33: #{tpu_custom_call.1} parent=23 // pred_check
          %p110 = pneg %p48
        $region34: #{tpu_custom_call.1} parent=23 // pred_check_branch
          %112 = sbr.rel (%p110) target = $region36
        $region35: #{tpu_custom_call.1} parent=23 // pred_region
          %113 = dma.done [#allocation4], 128
        $region36: #{tpu_custom_call.1} parent=23 // pred_fallthru
          _
      $region24: #{tpu_custom_call.1} parent=5 // pred_fallthru
        _
      %p114 = scmp.le.s32.totalorder 2, %s9
      // Predicated region
      $region37: #{tpu_custom_call.1} parent=5 // pred_check
        %p115 = pneg %p114
      $region38: #{tpu_custom_call.1} parent=5 // pred_check_branch
        %117 = sbr.rel (%p115) target = $region40
      $region39: #{tpu_custom_call.1} parent=5 // pred_region
        %s118 = ssub.s32 %s9, 2
      $region40: #{tpu_custom_call.1} parent=5 // pred_fallthru
        _
    $region6: #{tpu_custom_call.1} parent=1 // loop_footer
      %s13 = sadd.s32 1, %s9
    $region7: #{tpu_custom_call.1} parent=1 // loop_footer_branch
      %8 = sbr.rel target = $region3
    $region8: #{tpu_custom_call.1} parent=1 // loop_exit
      _
    %119 = vsyncpa [#allocation3], 1
    %s120 = scalar_lea.sflag [#allocation3], 1
    %121 = vsyncpa %s120, 1
    %122 = vsyncpa [#allocation4], 1
    %s123 = scalar_lea.sflag [#allocation4], 1
    %124 = vsyncpa %s123, 1

// kernel: _forward.1
$region0: #{_forward.1}
  #allocation0 [shape = 'u32[]', space=smem, size = 0x4, offset = 0x4, fixed_abs, tag = 'smem constant byte address 0x4 - core index']
  #allocation1 [shape = 'u32[144,128]{1,0:T(1,128)}', space=vmem, size = 0x12000, scoped, tag = 'internal scratch']
  %s0 = inlined_call_operand.vmem [shape: f32[2,8,32], index: 0, kind: input, shape index: {}]
  %s1 = inlined_call_operand.vmem [shape: f32[1,32], index: 1, kind: input, shape index: {}]
  %s2 = inlined_call_operand.vmem [shape: f32[1,32], index: 2, kind: input, shape index: {}]
  %s3 = inlined_call_operand.vmem [shape: bf16[1,32,96], index: 3, kind: input, shape index: {}]
  %s4 = inlined_call_operand.vmem [shape: f32[1,1,96], index: 4, kind: input, shape index: {}]
  %s5 = inlined_call_operand.vmem [shape: bf16[1,32,32], index: 5, kind: input, shape index: {}]
  %s6 = inlined_call_operand.vmem [shape: f32[1,32], index: 6, kind: input, shape index: {}]
  %s7 = inlined_call_operand.vmem [shape: f32[1,32], index: 7, kind: input, shape index: {}]
  %s8 = inlined_call_operand.vmem [shape: f32[1,32], index: 8, kind: input, shape index: {}]
  %s9 = inlined_call_operand.vmem [shape: bf16[1,32,128], index: 9, kind: input, shape index: {}]
  %s10 = inlined_call_operand.vmem [shape: f32[1,1,128], index: 10, kind: input, shape index: {}]
  %s11 = inlined_call_operand.vmem [shape: bf16[1,128,32], index: 11, kind: input, shape index: {}]
  %s12 = inlined_call_operand.vmem [shape: f32[1,32], index: 12, kind: input, shape index: {}]
  %s13 = inlined_call_operand.hbm [shape: f32[2,8,32], index: 13, kind: output, shape index: {}]
  %s14 = sld [smem:[#allocation0]]
  $region85: #{_forward.1} parent=0
    _
  %s16 = ssub.s32 1, %s14
  %s17 = scalar_select 0, %s16, %s14
  $region1: #{_forward.1} parent=0
    #allocation2 [shape = 'u8[8192]{0}', space=vmem, size = 0x2000, scoped, tag = 'output window, operand 0']
    #allocation3 [shape = 's32[2]{0}', space=sflag, size = 0x8, scoped, tag = 'scoped memory for _forward.1']
    %18 = vsyncpa [#allocation3], 0
    %s19 = scalar_lea.sflag [#allocation3], 1
    %20 = vsyncpa %s19, 0
    loop: start=0, step=1, limit=4
    $region2: #{_forward.1} parent=1 // loop_pre_header
      _
    $region3: #{_forward.1} parent=1 // loop_header
      %s22 = sphi 0, %s26
      %p23 = scmp.ge.s32.totalorder %s22, 4
      %s32 = sphi 0, %s34
      %s35 = sphi 0, %s32
      %s36 = sphi 0, %s35
      %s52 = sphi 0, %s36
      %s56 = sphi 0, %s56
      %s58 = sphi 0, %s56
      %s59 = sphi 0, %s58
      %s73 = sphi 0, %s59
      %s77 = sphi 0, %s77
      %s79 = sphi 0, %s77
      %s80 = sphi 0, %s79
      %s94 = sphi 0, %s80
      %s98 = sphi 0, %s98
      %s100 = sphi 0, %s98
      %s101 = sphi 0, %s100
      %s115 = sphi 0, %s101
      %s119 = sphi 0, %s119
      %s121 = sphi 0, %s119
      %s122 = sphi 0, %s121
      %s136 = sphi 0, %s122
      %s140 = sphi 0, %s140
      %s142 = sphi 0, %s140
      %s143 = sphi 0, %s142
      %s157 = sphi 0, %s143
      %s161 = sphi 0, %s161
      %s163 = sphi 0, %s161
      %s164 = sphi 0, %s163
      %s178 = sphi 0, %s164
      %s182 = sphi 0, %s182
      %s184 = sphi 0, %s182
      %s185 = sphi 0, %s184
      %s199 = sphi 0, %s185
      %s203 = sphi 0, %s203
      %s205 = sphi 0, %s203
      %s206 = sphi 0, %s205
      %s220 = sphi 0, %s206
      %s224 = sphi 0, %s224
      %s226 = sphi 0, %s224
      %s227 = sphi 0, %s226
      %s241 = sphi 0, %s227
      %s245 = sphi 0, %s245
      %s247 = sphi 0, %s245
      %s248 = sphi 0, %s247
      %s262 = sphi 0, %s248
      %s266 = sphi 0, %s266
      %s268 = sphi 0, %s266
      %s269 = sphi 0, %s268
      %s283 = sphi 0, %s269
      %s287 = sphi 0, %s287
      %s289 = sphi 0, %s287
      %s290 = sphi 0, %s289
      %s304 = sphi 0, %s290
      %s310 = sphi 0, %s312
      %s313 = sphi 0, %s310
      %s314 = sphi 0, %s313
      %s330 = sphi 0, %s314
    $region4: #{_forward.1} parent=1 // loop_header_branch
      %25 = sbr.rel (%p23) target = $region8
    $region5: #{_forward.1} parent=1 // loop_body
      %s27 = ssub.s32 %s22, 1
      %s28 = ssub.s32 %s22, 2
      %s29 = sadd.s32 %s22, 1
      %s30 = ssub.s32 %s22, %s29
      %p31 = scmp.eq.s32.totalorder %s30, 0
      %s33 = sadd.s32 %s32, 1
      %s34 = scalar_select %p31, %s32, %s33
      %p37 = pneg %p31
      %p38 = scmp.eq.s32.totalorder %s22, 1
      %p39 = por %p37, %p38
      %p40 = scmp.ne.s32.totalorder %s32, %s35
      %p41 = scmp.eq.s32.totalorder %s22, 0
      %p42 = por %p40, %p41
      %p43 = scmp.ne.s32.totalorder %s32, %s35
      %p44 = scmp.eq.s32.totalorder %s27, 1
      %p45 = por %p43, %p44
      %p46 = scmp.ne.s32.totalorder %s35, %s36
      %p47 = scmp.eq.s32.totalorder %s27, 0
      %p48 = por %p46, %p47
      %p49 = scmp.ne.s32.totalorder %s35, %s36
      %p50 = scmp.eq.s32.totalorder %s28, 1
      %p51 = por %p49, %p50
      %p53 = scmp.ne.s32.totalorder %s36, %s52
      %p54 = scmp.eq.s32.totalorder %s28, 0
      %p55 = por %p53, %p54
      %s57 = sadd.s32 %s56, 1
      %p60 = scmp.eq.s32.totalorder %s22, 1
      %p61 = scmp.ne.s32.totalorder %s56, %s58
      %p62 = scmp.eq.s32.totalorder %s22, 0
      %p63 = por %p61, %p62
      %p64 = scmp.ne.s32.totalorder %s56, %s58
      %p65 = scmp.eq.s32.totalorder %s27, 1
      %p66 = por %p64, %p65
      %p67 = scmp.ne.s32.totalorder %s58, %s59
      %p68 = scmp.eq.s32.totalorder %s27, 0
      %p69 = por %p67, %p68
      %p70 = scmp.ne.s32.totalorder %s58, %s59
      %p71 = scmp.eq.s32.totalorder %s28, 1
      %p72 = por %p70, %p71
      %p74 = scmp.ne.s32.totalorder %s59, %s73
      %p75 = scmp.eq.s32.totalorder %s28, 0
      %p76 = por %p74, %p75
      %s78 = sadd.s32 %s77, 1
      %p81 = scmp.eq.s32.totalorder %s22, 1
      %p82 = scmp.ne.s32.totalorder %s77, %s79
      %p83 = scmp.eq.s32.totalorder %s22, 0
      %p84 = por %p82, %p83
      %p85 = scmp.ne.s32.totalorder %s77, %s79
      %p86 = scmp.eq.s32.totalorder %s27, 1
      %p87 = por %p85, %p86
      %p88 = scmp.ne.s32.totalorder %s79, %s80
      %p89 = scmp.eq.s32.totalorder %s27, 0
      %p90 = por %p88, %p89
      %p91 = scmp.ne.s32.totalorder %s79, %s80
      %p92 = scmp.eq.s32.totalorder %s28, 1
      %p93 = por %p91, %p92
      %p95 = scmp.ne.s32.totalorder %s80, %s94
      %p96 = scmp.eq.s32.totalorder %s28, 0
      %p97 = por %p95, %p96
      %s99 = sadd.s32 %s98, 1
      %p102 = scmp.eq.s32.totalorder %s22, 1
      %p103 = scmp.ne.s32.totalorder %s98, %s100
      %p104 = scmp.eq.s32.totalorder %s22, 0
      %p105 = por %p103, %p104
      %p106 = scmp.ne.s32.totalorder %s98, %s100
      %p107 = scmp.eq.s32.totalorder %s27, 1
      %p108 = por %p106, %p107
      %p109 = scmp.ne.s32.totalorder %s100, %s101
      %p110 = scmp.eq.s32.totalorder %s27, 0
      %p111 = por %p109, %p110
      %p112 = scmp.ne.s32.totalorder %s100, %s101
      %p113 = scmp.eq.s32.totalorder %s28, 1
      %p114 = por %p112, %p113
      %p116 = scmp.ne.s32.totalorder %s101, %s115
      %p117 = scmp.eq.s32.totalorder %s28, 0
      %p118 = por %p116, %p117
      %s120 = sadd.s32 %s119, 1
      %p123 = scmp.eq.s32.totalorder %s22, 1
      %p124 = scmp.ne.s32.totalorder %s119, %s121
      %p125 = scmp.eq.s32.totalorder %s22, 0
      %p126 = por %p124, %p125
      %p127 = scmp.ne.s32.totalorder %s119, %s121
      %p128 = scmp.eq.s32.totalorder %s27, 1
      %p129 = por %p127, %p128
      %p130 = scmp.ne.s32.totalorder %s121, %s122
      %p131 = scmp.eq.s32.totalorder %s27, 0
      %p132 = por %p130, %p131
      %p133 = scmp.ne.s32.totalorder %s121, %s122
      %p134 = scmp.eq.s32.totalorder %s28, 1
      %p135 = por %p133, %p134
      %p137 = scmp.ne.s32.totalorder %s122, %s136
      %p138 = scmp.eq.s32.totalorder %s28, 0
      %p139 = por %p137, %p138
      %s141 = sadd.s32 %s140, 1
      %p144 = scmp.eq.s32.totalorder %s22, 1
      %p145 = scmp.ne.s32.totalorder %s140, %s142
      %p146 = scmp.eq.s32.totalorder %s22, 0
      %p147 = por %p145, %p146
      %p148 = scmp.ne.s32.totalorder %s140, %s142
      %p149 = scmp.eq.s32.totalorder %s27, 1
      %p150 = por %p148, %p149
      %p151 = scmp.ne.s32.totalorder %s142, %s143
      %p152 = scmp.eq.s32.totalorder %s27, 0
      %p153 = por %p151, %p152
      %p154 = scmp.ne.s32.totalorder %s142, %s143
      %p155 = scmp.eq.s32.totalorder %s28, 1
      %p156 = por %p154, %p155
      %p158 = scmp.ne.s32.totalorder %s143, %s157
      %p159 = scmp.eq.s32.totalorder %s28, 0
      %p160 = por %p158, %p159
      %s162 = sadd.s32 %s161, 1
      %p165 = scmp.eq.s32.totalorder %s22, 1
      %p166 = scmp.ne.s32.totalorder %s161, %s163
      %p167 = scmp.eq.s32.totalorder %s22, 0
      %p168 = por %p166, %p167
      %p169 = scmp.ne.s32.totalorder %s161, %s163
      %p170 = scmp.eq.s32.totalorder %s27, 1
      %p171 = por %p169, %p170
      %p172 = scmp.ne.s32.totalorder %s163, %s164
      %p173 = scmp.eq.s32.totalorder %s27, 0
      %p174 = por %p172, %p173
      %p175 = scmp.ne.s32.totalorder %s163, %s164
      %p176 = scmp.eq.s32.totalorder %s28, 1
      %p177 = por %p175, %p176
      %p179 = scmp.ne.s32.totalorder %s164, %s178
      %p180 = scmp.eq.s32.totalorder %s28, 0
      %p181 = por %p179, %p180
      %s183 = sadd.s32 %s182, 1
      %p186 = scmp.eq.s32.totalorder %s22, 1
      %p187 = scmp.ne.s32.totalorder %s182, %s184
      %p188 = scmp.eq.s32.totalorder %s22, 0
      %p189 = por %p187, %p188
      %p190 = scmp.ne.s32.totalorder %s182, %s184
      %p191 = scmp.eq.s32.totalorder %s27, 1
      %p192 = por %p190, %p191
      %p193 = scmp.ne.s32.totalorder %s184, %s185
      %p194 = scmp.eq.s32.totalorder %s27, 0
      %p195 = por %p193, %p194
      %p196 = scmp.ne.s32.totalorder %s184, %s185
      %p197 = scmp.eq.s32.totalorder %s28, 1
      %p198 = por %p196, %p197
      %p200 = scmp.ne.s32.totalorder %s185, %s199
      %p201 = scmp.eq.s32.totalorder %s28, 0
      %p202 = por %p200, %p201
      %s204 = sadd.s32 %s203, 1
      %p207 = scmp.eq.s32.totalorder %s22, 1
      %p208 = scmp.ne.s32.totalorder %s203, %s205
      %p209 = scmp.eq.s32.totalorder %s22, 0
      %p210 = por %p208, %p209
      %p211 = scmp.ne.s32.totalorder %s203, %s205
      %p212 = scmp.eq.s32.totalorder %s27, 1
      %p213 = por %p211, %p212
      %p214 = scmp.ne.s32.totalorder %s205, %s206
      %p215 = scmp.eq.s32.totalorder %s27, 0
      %p216 = por %p214, %p215
      %p217 = scmp.ne.s32.totalorder %s205, %s206
      %p218 = scmp.eq.s32.totalorder %s28, 1
      %p219 = por %p217, %p218
      %p221 = scmp.ne.s32.totalorder %s206, %s220
      %p222 = scmp.eq.s32.totalorder %s28, 0
      %p223 = por %p221, %p222
      %s225 = sadd.s32 %s224, 1
      %p228 = scmp.eq.s32.totalorder %s22, 1
      %p229 = scmp.ne.s32.totalorder %s224, %s226
      %p230 = scmp.eq.s32.totalorder %s22, 0
      %p231 = por %p229, %p230
      %p232 = scmp.ne.s32.totalorder %s224, %s226
      %p233 = scmp.eq.s32.totalorder %s27, 1
      %p234 = por %p232, %p233
      %p235 = scmp.ne.s32.totalorder %s226, %s227
      %p236 = scmp.eq.s32.totalorder %s27, 0
      %p237 = por %p235, %p236
      %p238 = scmp.ne.s32.totalorder %s226, %s227
      %p239 = scmp.eq.s32.totalorder %s28, 1
      %p240 = por %p238, %p239
      %p242 = scmp.ne.s32.totalorder %s227, %s241
      %p243 = scmp.eq.s32.totalorder %s28, 0
      %p244 = por %p242, %p243
      %s246 = sadd.s32 %s245, 1
      %p249 = scmp.eq.s32.totalorder %s22, 1
      %p250 = scmp.ne.s32.totalorder %s245, %s247
      %p251 = scmp.eq.s32.totalorder %s22, 0
      %p252 = por %p250, %p251
      %p253 = scmp.ne.s32.totalorder %s245, %s247
      %p254 = scmp.eq.s32.totalorder %s27, 1
      %p255 = por %p253, %p254
      %p256 = scmp.ne.s32.totalorder %s247, %s248
      %p257 = scmp.eq.s32.totalorder %s27, 0
      %p258 = por %p256, %p257
      %p259 = scmp.ne.s32.totalorder %s247, %s248
      %p260 = scmp.eq.s32.totalorder %s28, 1
      %p261 = por %p259, %p260
      %p263 = scmp.ne.s32.totalorder %s248, %s262
      %p264 = scmp.eq.s32.totalorder %s28, 0
      %p265 = por %p263, %p264
      %s267 = sadd.s32 %s266, 1
      %p270 = scmp.eq.s32.totalorder %s22, 1
      %p271 = scmp.ne.s32.totalorder %s266, %s268
      %p272 = scmp.eq.s32.totalorder %s22, 0
      %p273 = por %p271, %p272
      %p274 = scmp.ne.s32.totalorder %s266, %s268
      %p275 = scmp.eq.s32.totalorder %s27, 1
      %p276 = por %p274, %p275
      %p277 = scmp.ne.s32.totalorder %s268, %s269
      %p278 = scmp.eq.s32.totalorder %s27, 0
      %p279 = por %p277, %p278
      %p280 = scmp.ne.s32.totalorder %s268, %s269
      %p281 = scmp.eq.s32.totalorder %s28, 1
      %p282 = por %p280, %p281
      %p284 = scmp.ne.s32.totalorder %s269, %s283
      %p285 = scmp.eq.s32.totalorder %s28, 0
      %p286 = por %p284, %p285
      %s288 = sadd.s32 %s287, 1
      %p291 = scmp.eq.s32.totalorder %s22, 1
      %p292 = scmp.ne.s32.totalorder %s287, %s289
      %p293 = scmp.eq.s32.totalorder %s22, 0
      %p294 = por %p292, %p293
      %p295 = scmp.ne.s32.totalorder %s287, %s289
      %p296 = scmp.eq.s32.totalorder %s27, 1
      %p297 = por %p295, %p296
      %p298 = scmp.ne.s32.totalorder %s289, %s290
      %p299 = scmp.eq.s32.totalorder %s27, 0
      %p300 = por %p298, %p299
      %p301 = scmp.ne.s32.totalorder %s289, %s290
      %p302 = scmp.eq.s32.totalorder %s28, 1
      %p303 = por %p301, %p302
      %p305 = scmp.ne.s32.totalorder %s290, %s304
      %p306 = scmp.eq.s32.totalorder %s28, 0
      %p307 = por %p305, %p306
      %s308 = ssub.s32 %s22, %s29
      %p309 = scmp.eq.s32.totalorder %s308, 0
      %s311 = sadd.s32 %s310, 1
      %s312 = scalar_select %p309, %s310, %s311
      %p315 = pneg %p309
      %p316 = scmp.eq.s32.totalorder %s22, 1
      %p317 = por %p315, %p316
      %p318 = scmp.ne.s32.totalorder %s310, %s313
      %p319 = scmp.eq.s32.totalorder %s22, 0
      %p320 = por %p318, %p319
      %p321 = scmp.ne.s32.totalorder %s310, %s313
      %p322 = scmp.eq.s32.totalorder %s27, 1
      %p323 = por %p321, %p322
      %p324 = scmp.ne.s32.totalorder %s313, %s314
      %p325 = scmp.eq.s32.totalorder %s27, 0
      %p326 = por %p324, %p325
      %p327 = scmp.ne.s32.totalorder %s313, %s314
      %p328 = scmp.eq.s32.totalorder %s28, 1
      %p329 = por %p327, %p328
      %p331 = scmp.ne.s32.totalorder %s314, %s330
      %p332 = scmp.eq.s32.totalorder %s28, 0
      %p333 = por %p331, %p332
      %p334 = scmp.le.s32.totalorder 1, %s22
      %p335 = scmp.lt.s32.totalorder %s22, 3
      %p336 = pnand %p334, %p335
      %p337 = pneg %p336
      // Predicated region
      $region9: #{_forward.1} parent=5 // pred_check
        _
      $region10: #{_forward.1} parent=5 // pred_check_branch
        %339 = sbr.rel (%p336) target = $region12
      $region11: #{_forward.1} parent=5 // pred_region
        %s340 = ssub.s32 %s22, 1
        // Predicated region
        $region13: #{_forward.1} parent=11 // pred_check
          %p341 = pneg %p69
        $region14: #{_forward.1} parent=11 // pred_check_branch
          %343 = sbr.rel (%p341) target = $region16
        $region15: #{_forward.1} parent=11 // pred_region
          _
        $region16: #{_forward.1} parent=11 // pred_fallthru
          _
        // Predicated region
        $region17: #{_forward.1} parent=11 // pred_check
          %p344 = pneg %p90
        $region18: #{_forward.1} parent=11 // pred_check_branch
          %346 = sbr.rel (%p344) target = $region20
        $region19: #{_forward.1} parent=11 // pred_region
          _
        $region20: #{_forward.1} parent=11 // pred_fallthru
          _
        // Predicated region
        $region21: #{_forward.1} parent=11 // pred_check
          %p347 = pneg %p111
        $region22: #{_forward.1} parent=11 // pred_check_branch
          %349 = sbr.rel (%p347) target = $region24
        $region23: #{_forward.1} parent=11 // pred_region
          _
        $region24: #{_forward.1} parent=11 // pred_fallthru
          _
        // Predicated region
        $region25: #{_forward.1} parent=11 // pred_check
          %p350 = pneg %p132
        $region26: #{_forward.1} parent=11 // pred_check_branch
          %352 = sbr.rel (%p350) target = $region28
        $region27: #{_forward.1} parent=11 // pred_region
          _
        $region28: #{_forward.1} parent=11 // pred_fallthru
          _
        // Predicated region
        $region29: #{_forward.1} parent=11 // pred_check
          %p353 = pneg %p153
        $region30: #{_forward.1} parent=11 // pred_check_branch
          %355 = sbr.rel (%p353) target = $region32
        $region31: #{_forward.1} parent=11 // pred_region
          _
        $region32: #{_forward.1} parent=11 // pred_fallthru
          _
        // Predicated region
        $region33: #{_forward.1} parent=11 // pred_check
          %p356 = pneg %p174
        $region34: #{_forward.1} parent=11 // pred_check_branch
          %358 = sbr.rel (%p356) target = $region36
        $region35: #{_forward.1} parent=11 // pred_region
          _
        $region36: #{_forward.1} parent=11 // pred_fallthru
          _
        // Predicated region
        $region37: #{_forward.1} parent=11 // pred_check
          %p359 = pneg %p195
        $region38: #{_forward.1} parent=11 // pred_check_branch
          %361 = sbr.rel (%p359) target = $region40
        $region39: #{_forward.1} parent=11 // pred_region
          _
        $region40: #{_forward.1} parent=11 // pred_fallthru
          _
        // Predicated region
        $region41: #{_forward.1} parent=11 // pred_check
          %p362 = pneg %p216
        $region42: #{_forward.1} parent=11 // pred_check_branch
          %364 = sbr.rel (%p362) target = $region44
        $region43: #{_forward.1} parent=11 // pred_region
          _
        $region44: #{_forward.1} parent=11 // pred_fallthru
          _
        // Predicated region
        $region45: #{_forward.1} parent=11 // pred_check
          %p365 = pneg %p237
        $region46: #{_forward.1} parent=11 // pred_check_branch
          %367 = sbr.rel (%p365) target = $region48
        $region47: #{_forward.1} parent=11 // pred_region
          _
        $region48: #{_forward.1} parent=11 // pred_fallthru
          _
        // Predicated region
        $region49: #{_forward.1} parent=11 // pred_check
          %p368 = pneg %p258
        $region50: #{_forward.1} parent=11 // pred_check_branch
          %370 = sbr.rel (%p368) target = $region52
        $region51: #{_forward.1} parent=11 // pred_region
          _
        $region52: #{_forward.1} parent=11 // pred_fallthru
          _
        // Predicated region
        $region53: #{_forward.1} parent=11 // pred_check
          %p371 = pneg %p279
        $region54: #{_forward.1} parent=11 // pred_check_branch
          %373 = sbr.rel (%p371) target = $region56
        $region55: #{_forward.1} parent=11 // pred_region
          _
        $region56: #{_forward.1} parent=11 // pred_fallthru
          _
        // Predicated region
        $region57: #{_forward.1} parent=11 // pred_check
          %p374 = pneg %p300
        $region58: #{_forward.1} parent=11 // pred_check_branch
          %376 = sbr.rel (%p374) target = $region60
        $region59: #{_forward.1} parent=11 // pred_region
          _
        $region60: #{_forward.1} parent=11 // pred_fallthru
          _
      $region12: #{_forward.1} parent=5 // pred_fallthru
        _
      %p377 = scmp.lt.s32.totalorder %s22, 2
      // Predicated region
      $region61: #{_forward.1} parent=5 // pred_check
        %p378 = pneg %p377
      $region62: #{_forward.1} parent=5 // pred_check_branch
        %380 = sbr.rel (%p378) target = $region64
      $region63: #{_forward.1} parent=5 // pred_region
        // Predicated region
        $region65: #{_forward.1} parent=63 // pred_check
          %p381 = pneg %p42
        $region66: #{_forward.1} parent=63 // pred_check_branch
          %383 = sbr.rel (%p381) target = $region68
        $region67: #{_forward.1} parent=63 // pred_region
          %p384 = scmp.lt.s32.totalorder %s22, 1
          %s385 = scalar_select %p384, %s22, 1
          %s386 = smul.addr %s385, 8
          %s387 = scalar_lea.vmem %s0, %s386
        $region68: #{_forward.1} parent=63 // pred_fallthru
          _
      $region64: #{_forward.1} parent=5 // pred_fallthru
        _
      %p388 = scmp.le.s32.totalorder 1, %s22
      %p389 = scmp.lt.s32.totalorder %s22, 3
      %p390 = pnand %p388, %p389
      %p391 = pneg %p390
      // Predicated region
      $region69: #{_forward.1} parent=5 // pred_check
        _
      $region70: #{_forward.1} parent=5 // pred_check_branch
        %393 = sbr.rel (%p390) target = $region72
      $region71: #{_forward.1} parent=5 // pred_region
        %s394 = ssub.s32 %s22, 1
        %p395 = scmp.lt.s32.totalorder %s27, 1
        %s396 = scalar_select %p395, %s27, 1
        %s397 = smul.addr %s396, 8
        %s398 = scalar_lea.vmem %s0, %s397
        %p399 = pneg %p48
        %p400 = pneg %p45
        %p401 = pneg %p69
        %p402 = pneg %p66
        %p403 = pneg %p90
        %p404 = pneg %p87
        %p405 = pneg %p111
        %p406 = pneg %p108
        %p407 = pneg %p132
        %p408 = pneg %p129
        %p409 = pneg %p153
        %p410 = pneg %p150
        %p411 = pneg %p174
        %p412 = pneg %p171
        %p413 = pneg %p195
        %p414 = pneg %p192
        %p415 = pneg %p216
        %p416 = pneg %p213
        %p417 = pneg %p237
        %p418 = pneg %p234
        %p419 = pneg %p258
        %p420 = pneg %p255
        %p421 = pneg %p279
        %p422 = pneg %p276
        %p423 = pneg %p300
        %p424 = pneg %p297
        %p425 = pneg %p326
        %p426 = pneg %p323
        %s427 = sand.u32 %s313, 1
        %s428 = scalar_lea.sflag [#allocation3], %s427
        %s429 = sand.u32 %s313, 1
        %s430 = smul.addr %s429, 8
        %s431 = scalar_lea.vmem [#allocation2], %s430
        %p432 = scmp.lt.s32.totalorder %s27, 1
        %s433 = scalar_select %p432, %s27, 1
        %s434 = smul.addr %s433, 8
        %s435 = scalar_lea.vmem %s0, %s434
        %v437 = vld [vmem:[%s435] sm:$0xff]
        %v438 = vld [vmem:[%s1] sm:$0x1]
        %v439 = vld [vmem:[%s2] sm:$0x1]
        %vm440 = vcmask 261120
        %v441 = vsel %vm440, %v437, 0.0
        %442 = vadd.xlane.f32.xlu0 %v441
        %v443 = vpop.xlane.xlu0 %442
        %v444 = vrcp.pop 32.0
        %v445 = vmul.f32 %v443, %v444
        %v446 = vsub.f32 %v437, %v445
        %v447 = vmul.f32 %v446, %v446
        %v448 = vsel %vm440, %v447, 0.0
        %449 = vadd.xlane.f32.xlu0 %v448
        %v450 = vpop.xlane.xlu0 %449
        %v451 = vmul.f32 %v450, %v444
        %v452 = vadd.f32 %v451, 1e-05
        %v453 = vrsqrt.pop %v452
        %v454 = vmul.f32 %v446, %v453
        %v456 = vlaneseq
        %v457 = vshrl.u32 %v456, 7
        %v458 = vsub.s32 0, %v457
        %v459 = vrot.slane %v438, %v458
        %v461 = vmul.f32 %v454, %v459
        %v463 = vlaneseq
        %v464 = vshrl.u32 %v463, 7
        %v465 = vsub.s32 0, %v464
        %v466 = vrot.slane %v439, %v465
        %v468 = vadd.f32 %v461, %v466
        %v469 = vpack.c.bf16 %v468, %v468
        %v470 = vld [vmem:[%s3] sm:$0xf]
        %v471 = vld [vmem:[%s3 + $0x4] sm:$0xf]
        %v472 = vld [vmem:[%s3 + $0x8] sm:$0xf]
        %v473 = vld [vmem:[%s3 + $0xc] sm:$0xf]
        %v474 = vld [vmem:[%s4] sm:$0x1]
        %v476 = vlaneseq
        %v477 = vshrl.u32 %v476, 7
        %v478 = vsub.s32 0, %v477
        %v479 = vrot.slane %v474, %v478
        %v485 = vunpack.c.l.b16 %v470
        %v486 = vunpack.c.l.b16 %v471
        %v487 = vunpack.c.l.b16 %v472
        %v488 = vunpack.c.l.b16 %v473
        %v489 = vpack.c.b16 %v486, %v485
        %v490 = vpack.c.b16 %v488, %v487
        %v494 = vsel %vm440, %v469, 0
        %496 = vmatprep.subr.bf16.mxu0 0
        %497 = vmatpush1.bf16.msra.mxu0 %v489
        %498 = vmatprep.subr.bf16.mxu0 0
        %499 = vmatpush1.bf16.msra.mxu0 %v490
        %500 = vmatprep.subr.bf16.mxu0 0
        %501 = vmatpush1.bf16.msra.mxu0 0
        %502 = vmatprep.subr.bf16.mxu0 0
        %503 = vmatpush1.bf16.msra.mxu0 0
        %504 = vmatprep.subr.bf16.mxu0 0
        %505 = vmatpush1.bf16.msra.mxu0 0
        %506 = vmatprep.subr.bf16.mxu0 0
        %507 = vmatpush1.bf16.msra.mxu0 0
        %508 = vmatprep.subr.bf16.mxu0 0
        %509 = vmatpush1.bf16.msra.mxu0 0
        %510 = vmatprep.subr.bf16.mxu0 0
        %511 = vmatpush1.bf16.msra.mxu0 0
        %512 = vmatprep.subr.bf16.mxu0 0
        %513 = vmatpush1.bf16.msra.mxu0 0
        %514 = vmatprep.subr.bf16.mxu0 0
        %515 = vmatpush1.bf16.msra.mxu0 0
        %516 = vmatprep.subr.bf16.mxu0 0
        %517 = vmatpush1.bf16.msra.mxu0 0
        %518 = vmatprep.subr.bf16.mxu0 0
        %519 = vmatpush1.bf16.msra.mxu0 0
        %520 = vmatprep.subr.bf16.mxu0 0
        %521 = vmatpush1.bf16.msra.mxu0 0
        %522 = vmatprep.subr.bf16.mxu0 0
        %523 = vmatpush1.bf16.msra.mxu0 0
        %524 = vmatprep.subr.bf16.mxu0 0
        %525 = vmatpush1.bf16.msra.mxu0 0
        %526 = vmatprep.subr.bf16.mxu0 0
        %527 = vmatpush1.bf16.msra.mxu0 0
        %528 = vmatprep.mubr.bf16.mxu0 0
        %529 = vmatmul.mubr.bf16.gmra.mrb[0].mxu0 %v494
        %v530 = vpop.f32.mrb[0].mxu0
        %v531 = vadd.f32 %v479, %v530
        %v532 = vpop.f32.mrb[0].mxu0
        %v533 = vpop.f32.mrb[0].mxu0
        %v534 = vpop.f32.mrb[0].mxu0
        %535 = vdwg.mxu0
        %v536 = vlaneseq
        %v537 = vshrl.u32 %v536, 7
        %v538 = vlaneseq
        %v539 = vand.u32 %v538, 127
        %vm540 = vcmp.le.s32.totalorder %v539, %v537
        %v541 = vpack.c.bf16 %v531, %v531
        %543 = vrot.lane.b32.xlu0 %v541, 96
        %v544 = vpop.permute.xlu0 %543
        %vm545 = vcmask 64512
        %v547 = vsel %vm545, %v541, 0
        %v550 = vsel %vm545, %v544, 0
        %552 = vmatprep.subr.bf16.mxu0 0
        %553 = vmatpush1.bf16.xpose.msra.mxu0 %v550
        %554 = vmatprep.subr.bf16.mxu0 0
        %555 = vmatpush1.bf16.xpose.msra.mxu0 0
        %556 = vmatprep.subr.bf16.mxu0 0
        %557 = vmatpush1.bf16.xpose.msra.mxu0 0
        %558 = vmatprep.subr.bf16.mxu0 0
        %559 = vmatpush1.bf16.xpose.msra.mxu0 0
        %560 = vmatprep.subr.bf16.mxu0 0
        %561 = vmatpush1.bf16.xpose.msra.mxu0 0
        %562 = vmatprep.subr.bf16.mxu0 0
        %563 = vmatpush1.bf16.xpose.msra.mxu0 0
        %564 = vmatprep.subr.bf16.mxu0 0
        %565 = vmatpush1.bf16.xpose.msra.mxu0 0
        %566 = vmatprep.subr.bf16.mxu0 0
        %567 = vmatpush1.bf16.xpose.msra.mxu0 0
        %568 = vmatprep.subr.bf16.mxu0 0
        %569 = vmatpush1.bf16.xpose.msra.mxu0 0
        %570 = vmatprep.subr.bf16.mxu0 0
        %571 = vmatpush1.bf16.xpose.msra.mxu0 0
        %572 = vmatprep.subr.bf16.mxu0 0
        %573 = vmatpush1.bf16.xpose.msra.mxu0 0
        %574 = vmatprep.subr.bf16.mxu0 0
        %575 = vmatpush1.bf16.xpose.msra.mxu0 0
        %576 = vmatprep.subr.bf16.mxu0 0
        %577 = vmatpush1.bf16.xpose.msra.mxu0 0
        %578 = vmatprep.subr.bf16.mxu0 0
        %579 = vmatpush1.bf16.xpose.msra.mxu0 0
        %580 = vmatprep.subr.bf16.mxu0 0
        %581 = vmatpush1.bf16.xpose.msra.mxu0 0
        %582 = vmatprep.subr.bf16.mxu0 0
        %583 = vmatpush1.bf16.xpose.msra.mxu0 0
        %584 = vmatprep.mubr.bf16.mxu0 0
        %585 = vmatmul.mubr.bf16.gmra.mrb[0].mxu0 %v547
        %v586 = vpop.f32.mrb[0].mxu0
        %v587 = vadd.f32 0.0, %v586
        %v588 = vpop.f32.mrb[0].mxu0
        %v589 = vpop.f32.mrb[0].mxu0
        %v590 = vpop.f32.mrb[0].mxu0
        %591 = vdwg.mxu0
        %v592 = vsel %vm540, %v587, -1e+30
        %v593 = vsel %vm545, %v592, -inf
        %594 = vmax.xlane.f32.xlu0 %v593
        %v595 = vpop.xlane.xlu0 %594
        %v596 = vsub.f32 %v592, %v595
        %v597 = vmul.f32 %v596, 1.442695
        %v598 = vpow.pop %v597
        %v599 = vsel %vm545, %v598, 0.0
        %600 = vadd.xlane.f32.xlu0 %v599
        %v601 = vpop.xlane.xlu0 %600
        %v602 = vpack.c.bf16 %v598, %v598
        %603 = vrot.lane.b32.xlu0 %v541, 64
        %v604 = vpop.permute.xlu0 %603
        %v606 = vsel %vm545, %v602, 0
        %vm608 = vcmask 1043456
        %v610 = vsel %vm608, %v604, 0
        %612 = vmatprep.subr.bf16.mxu0 0
        %613 = vmatpush1.bf16.msra.mxu0 %v610
        %614 = vmatprep.subr.bf16.mxu0 0
        %615 = vmatpush1.bf16.msra.mxu0 0
        %616 = vmatprep.subr.bf16.mxu0 0
        %617 = vmatpush1.bf16.msra.mxu0 0
        %618 = vmatprep.subr.bf16.mxu0 0
        %619 = vmatpush1.bf16.msra.mxu0 0
        %620 = vmatprep.subr.bf16.mxu0 0
        %621 = vmatpush1.bf16.msra.mxu0 0
        %622 = vmatprep.subr.bf16.mxu0 0
        %623 = vmatpush1.bf16.msra.mxu0 0
        %624 = vmatprep.subr.bf16.mxu0 0
        %625 = vmatpush1.bf16.msra.mxu0 0
        %626 = vmatprep.subr.bf16.mxu0 0
        %627 = vmatpush1.bf16.msra.mxu0 0
        %628 = vmatprep.subr.bf16.mxu0 0
        %629 = vmatpush1.bf16.msra.mxu0 0
        %630 = vmatprep.subr.bf16.mxu0 0
        %631 = vmatpush1.bf16.msra.mxu0 0
        %632 = vmatprep.subr.bf16.mxu0 0
        %633 = vmatpush1.bf16.msra.mxu0 0
        %634 = vmatprep.subr.bf16.mxu0 0
        %635 = vmatpush1.bf16.msra.mxu0 0
        %636 = vmatprep.subr.bf16.mxu0 0
        %637 = vmatpush1.bf16.msra.mxu0 0
        %638 = vmatprep.subr.bf16.mxu0 0
        %639 = vmatpush1.bf16.msra.mxu0 0
        %640 = vmatprep.subr.bf16.mxu0 0
        %641 = vmatpush1.bf16.msra.mxu0 0
        %642 = vmatprep.subr.bf16.mxu0 0
        %643 = vmatpush1.bf16.msra.mxu0 0
        %644 = vmatprep.mubr.bf16.mxu0 0
        %645 = vmatmul.mubr.bf16.gmra.mrb[0].mxu0 %v606
        %v646 = vpop.f32.mrb[0].mxu0
        %v647 = vadd.f32 0.0, %v646
        %v648 = vpop.f32.mrb[0].mxu0
        %v649 = vpop.f32.mrb[0].mxu0
        %v650 = vpop.f32.mrb[0].mxu0
        %651 = vdwg.mxu0
        %v652 = vrcp.pop %v601
        %v653 = vmul.f32 %v647, %v652
        %v654 = vpack.c.bf16 %v653, %v653
        %655 = vrot.lane.b32.xlu0 %v541, 120
        %v656 = vpop.permute.xlu0 %655
        %657 = vrot.lane.b32.xlu0 %v541, 88
        %v658 = vpop.permute.xlu0 %657
        %v660 = vsel %vm545, %v656, 0
        %v663 = vsel %vm545, %v658, 0
        %665 = vmatprep.subr.bf16.mxu0 0
        %666 = vmatpush1.bf16.xpose.msra.mxu0 %v663
        %667 = vmatprep.subr.bf16.mxu0 0
        %668 = vmatpush1.bf16.xpose.msra.mxu0 0
        %669 = vmatprep.subr.bf16.mxu0 0
        %670 = vmatpush1.bf16.xpose.msra.mxu0 0
        %671 = vmatprep.subr.bf16.mxu0 0
        %672 = vmatpush1.bf16.xpose.msra.mxu0 0
        %673 = vmatprep.subr.bf16.mxu0 0
        %674 = vmatpush1.bf16.xpose.msra.mxu0 0
        %675 = vmatprep.subr.bf16.mxu0 0
        %676 = vmatpush1.bf16.xpose.msra.mxu0 0
        %677 = vmatprep.subr.bf16.mxu0 0
        %678 = vmatpush1.bf16.xpose.msra.mxu0 0
        %679 = vmatprep.subr.bf16.mxu0 0
        %680 = vmatpush1.bf16.xpose.msra.mxu0 0
        %681 = vmatprep.subr.bf16.mxu0 0
        %682 = vmatpush1.bf16.xpose.msra.mxu0 0
        %683 = vmatprep.subr.bf16.mxu0 0
        %684 = vmatpush1.bf16.xpose.msra.mxu0 0
        %685 = vmatprep.subr.bf16.mxu0 0
        %686 = vmatpush1.bf16.xpose.msra.mxu0 0
        %687 = vmatprep.subr.bf16.mxu0 0
        %688 = vmatpush1.bf16.xpose.msra.mxu0 0
        %689 = vmatprep.subr.bf16.mxu0 0
        %690 = vmatpush1.bf16.xpose.msra.mxu0 0
        %691 = vmatprep.subr.bf16.mxu0 0
        %692 = vmatpush1.bf16.xpose.msra.mxu0 0
        %693 = vmatprep.subr.bf16.mxu0 0
        %694 = vmatpush1.bf16.xpose.msra.mxu0 0
        %695 = vmatprep.subr.bf16.mxu0 0
        %696 = vmatpush1.bf16.xpose.msra.mxu0 0
        %697 = vmatprep.mubr.bf16.mxu0 0
        %698 = vmatmul.mubr.bf16.gmra.mrb[0].mxu0 %v660
        %v699 = vpop.f32.mrb[0].mxu0
        %v700 = vadd.f32 0.0, %v699
        %v701 = vpop.f32.mrb[0].mxu0
        %v702 = vpop.f32.mrb[0].mxu0
        %v703 = vpop.f32.mrb[0].mxu0
        %704 = vdwg.mxu0
        %v705 = vsel %vm540, %v700, -1e+30
        %v706 = vsel %vm545, %v705, -inf
        %707 = vmax.xlane.f32.xlu0 %v706
        %v708 = vpop.xlane.xlu0 %707
        %v709 = vsub.f32 %v705, %v708
        %v710 = vmul.f32 %v709, 1.442695
        %v711 = vpow.pop %v710
        %v712 = vsel %vm545, %v711, 0.0
        %713 = vadd.xlane.f32.xlu0 %v712
        %v714 = vpop.xlane.xlu0 %713
        %v715 = vpack.c.bf16 %v711, %v711
        %716 = vrot.lane.b32.xlu0 %v541, 56
        %v717 = vpop.permute.xlu0 %716
        %v719 = vsel %vm545, %v715, 0
        %v722 = vsel %vm608, %v717, 0
        %724 = vmatprep.subr.bf16.mxu0 0
        %725 = vmatpush1.bf16.msra.mxu0 %v722
        %726 = vmatprep.subr.bf16.mxu0 0
        %727 = vmatpush1.bf16.msra.mxu0 0
        %728 = vmatprep.subr.bf16.mxu0 0
        %729 = vmatpush1.bf16.msra.mxu0 0
        %730 = vmatprep.subr.bf16.mxu0 0
        %731 = vmatpush1.bf16.msra.mxu0 0
        %732 = vmatprep.subr.bf16.mxu0 0
        %733 = vmatpush1.bf16.msra.mxu0 0
        %734 = vmatprep.subr.bf16.mxu0 0
        %735 = vmatpush1.bf16.msra.mxu0 0
        %736 = vmatprep.subr.bf16.mxu0 0
        %737 = vmatpush1.bf16.msra.mxu0 0
        %738 = vmatprep.subr.bf16.mxu0 0
        %739 = vmatpush1.bf16.msra.mxu0 0
        %740 = vmatprep.subr.bf16.mxu0 0
        %741 = vmatpush1.bf16.msra.mxu0 0
        %742 = vmatprep.subr.bf16.mxu0 0
        %743 = vmatpush1.bf16.msra.mxu0 0
        %744 = vmatprep.subr.bf16.mxu0 0
        %745 = vmatpush1.bf16.msra.mxu0 0
        %746 = vmatprep.subr.bf16.mxu0 0
        %747 = vmatpush1.bf16.msra.mxu0 0
        %748 = vmatprep.subr.bf16.mxu0 0
        %749 = vmatpush1.bf16.msra.mxu0 0
        %750 = vmatprep.subr.bf16.mxu0 0
        %751 = vmatpush1.bf16.msra.mxu0 0
        %752 = vmatprep.subr.bf16.mxu0 0
        %753 = vmatpush1.bf16.msra.mxu0 0
        %754 = vmatprep.subr.bf16.mxu0 0
        %755 = vmatpush1.bf16.msra.mxu0 0
        %756 = vmatprep.mubr.bf16.mxu0 0
        %757 = vmatmul.mubr.bf16.gmra.mrb[0].mxu0 %v719
        %v758 = vpop.f32.mrb[0].mxu0
        %v759 = vadd.f32 0.0, %v758
        %v760 = vpop.f32.mrb[0].mxu0
        %v761 = vpop.f32.mrb[0].mxu0
        %v762 = vpop.f32.mrb[0].mxu0
        %763 = vdwg.mxu0
        %v764 = vrcp.pop %v714
        %v765 = vmul.f32 %v759, %v764
        %v766 = vpack.c.bf16 %v765, %v765
        %767 = vrot.lane.b32.xlu0 %v541, 112
        %v768 = vpop.permute.xlu0 %767
        %769 = vrot.lane.b32.xlu0 %v541, 80
        %v770 = vpop.permute.xlu0 %769
        %v772 = vsel %vm545, %v768, 0
        %v775 = vsel %vm545, %v770, 0
        %777 = vmatprep.subr.bf16.mxu0 0
        %778 = vmatpush1.bf16.xpose.msra.mxu0 %v775
        %779 = vmatprep.subr.bf16.mxu0 0
        %780 = vmatpush1.bf16.xpose.msra.mxu0 0
        %781 = vmatprep.subr.bf16.mxu0 0
        %782 = vmatpush1.bf16.xpose.msra.mxu0 0
        %783 = vmatprep.subr.bf16.mxu0 0
        %784 = vmatpush1.bf16.xpose.msra.mxu0 0
        %785 = vmatprep.subr.bf16.mxu0 0
        %786 = vmatpush1.bf16.xpose.msra.mxu0 0
        %787 = vmatprep.subr.bf16.mxu0 0
        %788 = vmatpush1.bf16.xpose.msra.mxu0 0
        %789 = vmatprep.subr.bf16.mxu0 0
        %790 = vmatpush1.bf16.xpose.msra.mxu0 0
        %791 = vmatprep.subr.bf16.mxu0 0
        %792 = vmatpush1.bf16.xpose.msra.mxu0 0
        %793 = vmatprep.subr.bf16.mxu0 0
        %794 = vmatpush1.bf16.xpose.msra.mxu0 0
        %795 = vmatprep.subr.bf16.mxu0 0
        %796 = vmatpush1.bf16.xpose.msra.mxu0 0
        %797 = vmatprep.subr.bf16.mxu0 0
        %798 = vmatpush1.bf16.xpose.msra.mxu0 0
        %799 = vmatprep.subr.bf16.mxu0 0
        %800 = vmatpush1.bf16.xpose.msra.mxu0 0
        %801 = vmatprep.subr.bf16.mxu0 0
        %802 = vmatpush1.bf16.xpose.msra.mxu0 0
        %803 = vmatprep.subr.bf16.mxu0 0
        %804 = vmatpush1.bf16.xpose.msra.mxu0 0
        %805 = vmatprep.subr.bf16.mxu0 0
        %806 = vmatpush1.bf16.xpose.msra.mxu0 0
        %807 = vmatprep.subr.bf16.mxu0 0
        %808 = vmatpush1.bf16.xpose.msra.mxu0 0
        %809 = vmatprep.mubr.bf16.mxu0 0
        %810 = vmatmul.mubr.bf16.gmra.mrb[0].mxu0 %v772
        %v811 = vpop.f32.mrb[0].mxu0
        %v812 = vadd.f32 0.0, %v811
        %v813 = vpop.f32.mrb[0].mxu0
        %v814 = vpop.f32.mrb[0].mxu0
        %v815 = vpop.f32.mrb[0].mxu0
        %816 = vdwg.mxu0
        %v817 = vsel %vm540, %v812, -1e+30
        %v818 = vsel %vm545, %v817, -inf
        %819 = vmax.xlane.f32.xlu0 %v818
        %v820 = vpop.xlane.xlu0 %819
        %v821 = vsub.f32 %v817, %v820
        %v822 = vmul.f32 %v821, 1.442695
        %v823 = vpow.pop %v822
        %v824 = vsel %vm545, %v823, 0.0
        %825 = vadd.xlane.f32.xlu0 %v824
        %v826 = vpop.xlane.xlu0 %825
        %v827 = vpack.c.bf16 %v823, %v823
        %828 = vrot.lane.b32.xlu0 %v541, 48
        %v829 = vpop.permute.xlu0 %828
        %v831 = vsel %vm545, %v827, 0
        %v834 = vsel %vm608, %v829, 0
        %836 = vmatprep.subr.bf16.mxu0 0
        %837 = vmatpush1.bf16.msra.mxu0 %v834
        %838 = vmatprep.subr.bf16.mxu0 0
        %839 = vmatpush1.bf16.msra.mxu0 0
        %840 = vmatprep.subr.bf16.mxu0 0
        %841 = vmatpush1.bf16.msra.mxu0 0
        %842 = vmatprep.subr.bf16.mxu0 0
        %843 = vmatpush1.bf16.msra.mxu0 0
        %844 = vmatprep.subr.bf16.mxu0 0
        %845 = vmatpush1.bf16.msra.mxu0 0
        %846 = vmatprep.subr.bf16.mxu0 0
        %847 = vmatpush1.bf16.msra.mxu0 0
        %848 = vmatprep.subr.bf16.mxu0 0
        %849 = vmatpush1.bf16.msra.mxu0 0
        %850 = vmatprep.subr.bf16.mxu0 0
        %851 = vmatpush1.bf16.msra.mxu0 0
        %852 = vmatprep.subr.bf16.mxu0 0
        %853 = vmatpush1.bf16.msra.mxu0 0
        %854 = vmatprep.subr.bf16.mxu0 0
        %855 = vmatpush1.bf16.msra.mxu0 0
        %856 = vmatprep.subr.bf16.mxu0 0
        %857 = vmatpush1.bf16.msra.mxu0 0
        %858 = vmatprep.subr.bf16.mxu0 0
        %859 = vmatpush1.bf16.msra.mxu0 0
        %860 = vmatprep.subr.bf16.mxu0 0
        %861 = vmatpush1.bf16.msra.mxu0 0
        %862 = vmatprep.subr.bf16.mxu0 0
        %863 = vmatpush1.bf16.msra.mxu0 0
        %864 = vmatprep.subr.bf16.mxu0 0
        %865 = vmatpush1.bf16.msra.mxu0 0
        %866 = vmatprep.subr.bf16.mxu0 0
        %867 = vmatpush1.bf16.msra.mxu0 0
        %868 = vmatprep.mubr.bf16.mxu0 0
        %869 = vmatmul.mubr.bf16.gmra.mrb[0].mxu0 %v831
        %v870 = vpop.f32.mrb[0].mxu0
        %v871 = vadd.f32 0.0, %v870
        %v872 = vpop.f32.mrb[0].mxu0
        %v873 = vpop.f32.mrb[0].mxu0
        %v874 = vpop.f32.mrb[0].mxu0
        %875 = vdwg.mxu0
        %v876 = vrcp.pop %v826
        %v877 = vmul.f32 %v871, %v876
        %v878 = vpack.c.bf16 %v877, %v877
        %879 = vrot.lane.b32.xlu0 %v541, 104
        %v880 = vpop.permute.xlu0 %879
        %881 = vrot.lane.b32.xlu0 %v541, 72
        %v882 = vpop.permute.xlu0 %881
        %v884 = vsel %vm545, %v880, 0
        %v887 = vsel %vm545, %v882, 0
        %889 = vmatprep.subr.bf16.mxu0 0
        %890 = vmatpush1.bf16.xpose.msra.mxu0 %v887
        %891 = vmatprep.subr.bf16.mxu0 0
        %892 = vmatpush1.bf16.xpose.msra.mxu0 0
        %893 = vmatprep.subr.bf16.mxu0 0
        %894 = vmatpush1.bf16.xpose.msra.mxu0 0
        %895 = vmatprep.subr.bf16.mxu0 0
        %896 = vmatpush1.bf16.xpose.msra.mxu0 0
        %897 = vmatprep.subr.bf16.mxu0 0
        %898 = vmatpush1.bf16.xpose.msra.mxu0 0
        %899 = vmatprep.subr.bf16.mxu0 0
        %900 = vmatpush1.bf16.xpose.msra.mxu0 0
        %901 = vmatprep.subr.bf16.mxu0 0
        %902 = vmatpush1.bf16.xpose.msra.mxu0 0
        %903 = vmatprep.subr.bf16.mxu0 0
        %904 = vmatpush1.bf16.xpose.msra.mxu0 0
        %905 = vmatprep.subr.bf16.mxu0 0
        %906 = vmatpush1.bf16.xpose.msra.mxu0 0
        %907 = vmatprep.subr.bf16.mxu0 0
        %908 = vmatpush1.bf16.xpose.msra.mxu0 0
        %909 = vmatprep.subr.bf16.mxu0 0
        %910 = vmatpush1.bf16.xpose.msra.mxu0 0
        %911 = vmatprep.subr.bf16.mxu0 0
        %912 = vmatpush1.bf16.xpose.msra.mxu0 0
        %913 = vmatprep.subr.bf16.mxu0 0
        %914 = vmatpush1.bf16.xpose.msra.mxu0 0
        %915 = vmatprep.subr.bf16.mxu0 0
        %916 = vmatpush1.bf16.xpose.msra.mxu0 0
        %917 = vmatprep.subr.bf16.mxu0 0
        %918 = vmatpush1.bf16.xpose.msra.mxu0 0
        %919 = vmatprep.subr.bf16.mxu0 0
        %920 = vmatpush1.bf16.xpose.msra.mxu0 0
        %921 = vmatprep.mubr.bf16.mxu0 0
        %922 = vmatmul.mubr.bf16.gmra.mrb[0].mxu0 %v884
        %v923 = vpop.f32.mrb[0].mxu0
        %v924 = vadd.f32 0.0, %v923
        %v925 = vpop.f32.mrb[0].mxu0
        %v926 = vpop.f32.mrb[0].mxu0
        %v927 = vpop.f32.mrb[0].mxu0
        %928 = vdwg.mxu0
        %v929 = vsel %vm540, %v924, -1e+30
        %v930 = vsel %vm545, %v929, -inf
        %931 = vmax.xlane.f32.xlu0 %v930
        %v932 = vpop.xlane.xlu0 %931
        %v933 = vsub.f32 %v929, %v932
        %v934 = vmul.f32 %v933, 1.442695
        %v935 = vpow.pop %v934
        %v936 = vsel %vm545, %v935, 0.0
        %937 = vadd.xlane.f32.xlu0 %v936
        %v938 = vpop.xlane.xlu0 %937
        %v939 = vpack.c.bf16 %v935, %v935
        %940 = vrot.lane.b32.xlu0 %v541, 40
        %v941 = vpop.permute.xlu0 %940
        %v943 = vsel %vm545, %v939, 0
        %v946 = vsel %vm608, %v941, 0
        %948 = vmatprep.subr.bf16.mxu0 0
        %949 = vmatpush1.bf16.msra.mxu0 %v946
        %950 = vmatprep.subr.bf16.mxu0 0
        %951 = vmatpush1.bf16.msra.mxu0 0
        %952 = vmatprep.subr.bf16.mxu0 0
        %953 = vmatpush1.bf16.msra.mxu0 0
        %954 = vmatprep.subr.bf16.mxu0 0
        %955 = vmatpush1.bf16.msra.mxu0 0
        %956 = vmatprep.subr.bf16.mxu0 0
        %957 = vmatpush1.bf16.msra.mxu0 0
        %958 = vmatprep.subr.bf16.mxu0 0
        %959 = vmatpush1.bf16.msra.mxu0 0
        %960 = vmatprep.subr.bf16.mxu0 0
        %961 = vmatpush1.bf16.msra.mxu0 0
        %962 = vmatprep.subr.bf16.mxu0 0
        %963 = vmatpush1.bf16.msra.mxu0 0
        %964 = vmatprep.subr.bf16.mxu0 0
        %965 = vmatpush1.bf16.msra.mxu0 0
        %966 = vmatprep.subr.bf16.mxu0 0
        %967 = vmatpush1.bf16.msra.mxu0 0
        %968 = vmatprep.subr.bf16.mxu0 0
        %969 = vmatpush1.bf16.msra.mxu0 0
        %970 = vmatprep.subr.bf16.mxu0 0
        %971 = vmatpush1.bf16.msra.mxu0 0
        %972 = vmatprep.subr.bf16.mxu0 0
        %973 = vmatpush1.bf16.msra.mxu0 0
        %974 = vmatprep.subr.bf16.mxu0 0
        %975 = vmatpush1.bf16.msra.mxu0 0
        %976 = vmatprep.subr.bf16.mxu0 0
        %977 = vmatpush1.bf16.msra.mxu0 0
        %978 = vmatprep.subr.bf16.mxu0 0
        %979 = vmatpush1.bf16.msra.mxu0 0
        %980 = vmatprep.mubr.bf16.mxu0 0
        %981 = vmatmul.mubr.bf16.gmra.mrb[0].mxu0 %v943
        %v982 = vpop.f32.mrb[0].mxu0
        %v983 = vadd.f32 0.0, %v982
        %v984 = vpop.f32.mrb[0].mxu0
        %v985 = vpop.f32.mrb[0].mxu0
        %v986 = vpop.f32.mrb[0].mxu0
        %987 = vdwg.mxu0
        %v988 = vrcp.pop %v938
        %v989 = vmul.f32 %v983, %v988
        %v990 = vpack.c.bf16 %v989, %v989
        %992 = vrot.lane.b32.xlu0 %v766, 8
        %v993 = vpop.permute.xlu0 %992
        %995 = vrot.lane.b32.xlu0 %v878, 16
        %v996 = vpop.permute.xlu0 %995
        %998 = vrot.lane.b32.xlu0 %v990, 24
        %v999 = vpop.permute.xlu0 %998
        %v1002 = vsel %vm545, %v654, %v993
        %vm1003 = vcmask 130048
        %v1005 = vsel %vm1003, %v1002, %v996
        %vm1006 = vcmask 195584
        %v1008 = vsel %vm1006, %v1005, %v999
        %v1009 = vld [vmem:[%s5] sm:$0xf]
        %v1010 = vld [vmem:[%s5 + $0x4] sm:$0xf]
        %v1011 = vld [vmem:[%s5 + $0x8] sm:$0xf]
        %v1012 = vld [vmem:[%s5 + $0xc] sm:$0xf]
        %v1017 = vunpack.c.l.b16 %v1009
        %v1018 = vunpack.c.l.b16 %v1010
        %v1019 = vunpack.c.l.b16 %v1011
        %v1020 = vunpack.c.l.b16 %v1012
        %v1021 = vpack.c.b16 %v1018, %v1017
        %v1022 = vpack.c.b16 %v1020, %v1019
        %v1025 = vsel %vm440, %v1008, 0
        %1027 = vmatprep.subr.bf16.mxu0 0
        %1028 = vmatpush1.bf16.msra.mxu0 %v1021
        %1029 = vmatprep.subr.bf16.mxu0 0
        %1030 = vmatpush1.bf16.msra.mxu0 %v1022
        %1031 = vmatprep.subr.bf16.mxu0 0
        %1032 = vmatpush1.bf16.msra.mxu0 0
        %1033 = vmatprep.subr.bf16.mxu0 0
        %1034 = vmatpush1.bf16.msra.mxu0 0
        %1035 = vmatprep.subr.bf16.mxu0 0
        %1036 = vmatpush1.bf16.msra.mxu0 0
        %1037 = vmatprep.subr.bf16.mxu0 0
        %1038 = vmatpush1.bf16.msra.mxu0 0
        %1039 = vmatprep.subr.bf16.mxu0 0
        %1040 = vmatpush1.bf16.msra.mxu0 0
        %1041 = vmatprep.subr.bf16.mxu0 0
        %1042 = vmatpush1.bf16.msra.mxu0 0
        %1043 = vmatprep.subr.bf16.mxu0 0
        %1044 = vmatpush1.bf16.msra.mxu0 0
        %1045 = vmatprep.subr.bf16.mxu0 0
        %1046 = vmatpush1.bf16.msra.mxu0 0
        %1047 = vmatprep.subr.bf16.mxu0 0
        %1048 = vmatpush1.bf16.msra.mxu0 0
        %1049 = vmatprep.subr.bf16.mxu0 0
        %1050 = vmatpush1.bf16.msra.mxu0 0
        %1051 = vmatprep.subr.bf16.mxu0 0
        %1052 = vmatpush1.bf16.msra.mxu0 0
        %1053 = vmatprep.subr.bf16.mxu0 0
        %1054 = vmatpush1.bf16.msra.mxu0 0
        %1055 = vmatprep.subr.bf16.mxu0 0
        %1056 = vmatpush1.bf16.msra.mxu0 0
        %1057 = vmatprep.subr.bf16.mxu0 0
        %1058 = vmatpush1.bf16.msra.mxu0 0
        %1059 = vmatprep.mubr.bf16.mxu0 0
        %1060 = vmatmul.mubr.bf16.gmra.mrb[0].mxu0 %v1025
        %v1061 = vpop.f32.mrb[0].mxu0
        %v1062 = vadd.f32 0.0, %v1061
        %v1063 = vpop.f32.mrb[0].mxu0
        %v1064 = vpop.f32.mrb[0].mxu0
        %v1065 = vpop.f32.mrb[0].mxu0
        %1066 = vdwg.mxu0
        %v1067 = vadd.f32 %v437, %v1062
        %v1068 = vld [vmem:[%s6] sm:$0x1]
        %v1070 = vlaneseq
        %v1071 = vshrl.u32 %v1070, 7
        %v1072 = vsub.s32 0, %v1071
        %v1073 = vrot.slane %v1068, %v1072
        %v1075 = vadd.f32 %v1067, %v1073
        %v1076 = vld [vmem:[%s7] sm:$0x1]
        %v1077 = vld [vmem:[%s8] sm:$0x1]
        %v1078 = vsel %vm440, %v1075, 0.0
        %1079 = vadd.xlane.f32.xlu0 %v1078
        %v1080 = vpop.xlane.xlu0 %1079
        %v1081 = vmul.f32 %v1080, %v444
        %v1082 = vsub.f32 %v1075, %v1081
        %v1083 = vmul.f32 %v1082, %v1082
        %v1084 = vsel %vm440, %v1083, 0.0
        %1085 = vadd.xlane.f32.xlu0 %v1084
        %v1086 = vpop.xlane.xlu0 %1085
        %v1087 = vmul.f32 %v1086, %v444
        %v1088 = vadd.f32 %v1087, 1e-05
        %v1089 = vrsqrt.pop %v1088
        %v1090 = vmul.f32 %v1082, %v1089
        %v1092 = vlaneseq
        %v1093 = vshrl.u32 %v1092, 7
        %v1094 = vsub.s32 0, %v1093
        %v1095 = vrot.slane %v1076, %v1094
        %v1097 = vmul.f32 %v1090, %v1095
        %v1099 = vlaneseq
        %v1100 = vshrl.u32 %v1099, 7
        %v1101 = vsub.s32 0, %v1100
        %v1102 = vrot.slane %v1077, %v1101
        %v1104 = vadd.f32 %v1097, %v1102
        %v1105 = vpack.c.bf16 %v1104, %v1104
        %v1106 = vld [vmem:[%s9] sm:$0xf]
        %v1107 = vld [vmem:[%s9 + $0x4] sm:$0xf]
        %v1108 = vld [vmem:[%s9 + $0x8] sm:$0xf]
        %v1109 = vld [vmem:[%s9 + $0xc] sm:$0xf]
        %v1110 = vld [vmem:[%s10] sm:$0x1]
        %v1112 = vlaneseq
        %v1113 = vshrl.u32 %v1112, 7
        %v1114 = vsub.s32 0, %v1113
        %v1115 = vrot.slane %v1110, %v1114
        %v1121 = vunpack.c.l.b16 %v1106
        %v1122 = vunpack.c.l.b16 %v1107
        %v1123 = vunpack.c.l.b16 %v1108
        %v1124 = vunpack.c.l.b16 %v1109
        %v1125 = vpack.c.b16 %v1122, %v1121
        %v1126 = vpack.c.b16 %v1124, %v1123
        %v1130 = vsel %vm440, %v1105, 0
        %1132 = vmatprep.subr.bf16.mxu0 0
        %1133 = vmatpush1.bf16.msra.mxu0 %v1125
        %1134 = vmatprep.subr.bf16.mxu0 0
        %1135 = vmatpush1.bf16.msra.mxu0 %v1126
        %1136 = vmatprep.subr.bf16.mxu0 0
        %1137 = vmatpush1.bf16.msra.mxu0 0
        %1138 = vmatprep.subr.bf16.mxu0 0
        %1139 = vmatpush1.bf16.msra.mxu0 0
        %1140 = vmatprep.subr.bf16.mxu0 0
        %1141 = vmatpush1.bf16.msra.mxu0 0
        %1142 = vmatprep.subr.bf16.mxu0 0
        %1143 = vmatpush1.bf16.msra.mxu0 0
        %1144 = vmatprep.subr.bf16.mxu0 0
        %1145 = vmatpush1.bf16.msra.mxu0 0
        %1146 = vmatprep.subr.bf16.mxu0 0
        %1147 = vmatpush1.bf16.msra.mxu0 0
        %1148 = vmatprep.subr.bf16.mxu0 0
        %1149 = vmatpush1.bf16.msra.mxu0 0
        %1150 = vmatprep.subr.bf16.mxu0 0
        %1151 = vmatpush1.bf16.msra.mxu0 0
        %1152 = vmatprep.subr.bf16.mxu0 0
        %1153 = vmatpush1.bf16.msra.mxu0 0
        %1154 = vmatprep.subr.bf16.mxu0 0
        %1155 = vmatpush1.bf16.msra.mxu0 0
        %1156 = vmatprep.subr.bf16.mxu0 0
        %1157 = vmatpush1.bf16.msra.mxu0 0
        %1158 = vmatprep.subr.bf16.mxu0 0
        %1159 = vmatpush1.bf16.msra.mxu0 0
        %1160 = vmatprep.subr.bf16.mxu0 0
        %1161 = vmatpush1.bf16.msra.mxu0 0
        %1162 = vmatprep.subr.bf16.mxu0 0
        %1163 = vmatpush1.bf16.msra.mxu0 0
        %1164 = vmatprep.mubr.bf16.mxu0 0
        %1165 = vmatmul.mubr.bf16.gmra.mrb[0].mxu0 %v1130
        %v1166 = vpop.f32.mrb[0].mxu0
        %v1167 = vadd.f32 %v1115, %v1166
        %v1168 = vpop.f32.mrb[0].mxu0
        %v1169 = vpop.f32.mrb[0].mxu0
        %v1170 = vpop.f32.mrb[0].mxu0
        %1171 = vdwg.mxu0
        %v1172 = vmul.f32 %v1167, 0.5
        %v1173 = vmul.f32 %v1167, 0.044715
        %v1174 = vmul.f32 %v1173, %v1167
        %v1175 = vmul.f32 %v1174, %v1167
        %v1176 = vadd.f32 %v1167, %v1175
        %v1177 = vmul.f32 %v1176, 0.7978846
        %v1178 = vtanh.pop %v1177
        %v1179 = vadd.f32 %v1178, 1.0
        %v1180 = vmul.f32 %v1172, %v1179
        %v1181 = vld [vmem:[%s11] sm:$0xf]
        %v1182 = vld [vmem:[%s11 + $0x4] sm:$0xf]
        %v1183 = vld [vmem:[%s11 + $0x8] sm:$0xf]
        %v1184 = vld [vmem:[%s11 + $0xc] sm:$0xf]
        %v1185 = vld [vmem:[%s11 + $0x10] sm:$0xf]
        %v1186 = vld [vmem:[%s11 + $0x14] sm:$0xf]
        %v1187 = vld [vmem:[%s11 + $0x18] sm:$0xf]
        %v1188 = vld [vmem:[%s11 + $0x1c] sm:$0xf]
        %v1189 = vld [vmem:[%s11 + $0x20] sm:$0xf]
        %v1190 = vld [vmem:[%s11 + $0x24] sm:$0xf]
        %v1191 = vld [vmem:[%s11 + $0x28] sm:$0xf]
        %v1192 = vld [vmem:[%s11 + $0x2c] sm:$0xf]
        %v1193 = vld [vmem:[%s11 + $0x30] sm:$0xf]
        %v1194 = vld [vmem:[%s11 + $0x34] sm:$0xf]
        %v1195 = vld [vmem:[%s11 + $0x38] sm:$0xf]
        %v1196 = vld [vmem:[%s11 + $0x3c] sm:$0xf]
        %v1197 = vpack.c.bf16 %v1180, %v1180
        %v1214 = vunpack.c.l.b16 %v1181
        %v1215 = vunpack.c.l.b16 %v1182
        %v1216 = vunpack.c.l.b16 %v1183
        %v1217 = vunpack.c.l.b16 %v1184
        %v1218 = vunpack.c.l.b16 %v1185
        %v1219 = vunpack.c.l.b16 %v1186
        %v1220 = vunpack.c.l.b16 %v1187
        %v1221 = vunpack.c.l.b16 %v1188
        %v1222 = vunpack.c.l.b16 %v1189
        %v1223 = vunpack.c.l.b16 %v1190
        %v1224 = vunpack.c.l.b16 %v1191
        %v1225 = vunpack.c.l.b16 %v1192
        %v1226 = vunpack.c.l.b16 %v1193
        %v1227 = vunpack.c.l.b16 %v1194
        %v1228 = vunpack.c.l.b16 %v1195
        %v1229 = vunpack.c.l.b16 %v1196
        %v1230 = vpack.c.b16 %v1215, %v1214
        %v1231 = vpack.c.b16 %v1217, %v1216
        %v1232 = vpack.c.b16 %v1219, %v1218
        %v1233 = vpack.c.b16 %v1221, %v1220
        %v1234 = vpack.c.b16 %v1223, %v1222
        %v1235 = vpack.c.b16 %v1225, %v1224
        %v1236 = vpack.c.b16 %v1227, %v1226
        %v1237 = vpack.c.b16 %v1229, %v1228
        %1246 = vmatprep.subr.bf16.mxu0 0
        %1247 = vmatpush1.bf16.msra.mxu0 %v1230
        %1248 = vmatprep.subr.bf16.mxu0 0
        %1249 = vmatpush1.bf16.msra.mxu0 %v1231
        %1250 = vmatprep.subr.bf16.mxu0 0
        %1251 = vmatpush1.bf16.msra.mxu0 %v1232
        %1252 = vmatprep.subr.bf16.mxu0 0
        %1253 = vmatpush1.bf16.msra.mxu0 %v1233
        %1254 = vmatprep.subr.bf16.mxu0 0
        %1255 = vmatpush1.bf16.msra.mxu0 %v1234
        %1256 = vmatprep.subr.bf16.mxu0 0
        %1257 = vmatpush1.bf16.msra.mxu0 %v1235
        %1258 = vmatprep.subr.bf16.mxu0 0
        %1259 = vmatpush1.bf16.msra.mxu0 %v1236
        %1260 = vmatprep.subr.bf16.mxu0 0
        %1261 = vmatpush1.bf16.msra.mxu0 %v1237
        %1262 = vmatprep.subr.bf16.mxu0 0
        %1263 = vmatpush1.bf16.msra.mxu0 0
        %1264 = vmatprep.subr.bf16.mxu0 0
        %1265 = vmatpush1.bf16.msra.mxu0 0
        %1266 = vmatprep.subr.bf16.mxu0 0
        %1267 = vmatpush1.bf16.msra.mxu0 0
        %1268 = vmatprep.subr.bf16.mxu0 0
        %1269 = vmatpush1.bf16.msra.mxu0 0
        %1270 = vmatprep.subr.bf16.mxu0 0
        %1271 = vmatpush1.bf16.msra.mxu0 0
        %1272 = vmatprep.subr.bf16.mxu0 0
        %1273 = vmatpush1.bf16.msra.mxu0 0
        %1274 = vmatprep.subr.bf16.mxu0 0
        %1275 = vmatpush1.bf16.msra.mxu0 0
        %1276 = vmatprep.subr.bf16.mxu0 0
        %1277 = vmatpush1.bf16.msra.mxu0 0
        %1278 = vmatprep.mubr.bf16.mxu0 0
        %1279 = vmatmul.mubr.bf16.gmra.mrb[0].mxu0 %v1197
        %v1280 = vpop.f32.mrb[0].mxu0
        %v1281 = vadd.f32 0.0, %v1280
        %v1282 = vpop.f32.mrb[0].mxu0
        %v1283 = vpop.f32.mrb[0].mxu0
        %v1284 = vpop.f32.mrb[0].mxu0
        %1285 = vdwg.mxu0
        %v1286 = vadd.f32 %v1075, %v1281
        %v1287 = vld [vmem:[%s12] sm:$0x1]
        %v1289 = vlaneseq
        %v1290 = vshrl.u32 %v1289, 7
        %v1291 = vsub.s32 0, %v1290
        %v1292 = vrot.slane %v1287, %v1291
        %v1294 = vadd.f32 %v1286, %v1292
        %1295 = vst.msk [vmem:[%s431] sm:$0xff] %vm440, %v1294
        %s1296 = sand.u32 %s313, 1
        %s1297 = scalar_lea.sflag [#allocation3], %s1296
        %s1298 = sand.u32 %s313, 1
        %s1299 = smul.addr %s1298, 8
        %s1300 = scalar_lea.vmem [#allocation2], %s1299
        // Predicated region
        $region73: #{_forward.1} parent=71 // pred_check
          %p1301 = pneg %p323
        $region74: #{_forward.1} parent=71 // pred_check_branch
          %1303 = sbr.rel (%p1301) target = $region76
        $region75: #{_forward.1} parent=71 // pred_region
          %s1305 = ssub.s32 128, 128
          %1306 = vsyncadd %s1297, %s1305
          %s1307 = smul.addr %s27, 128
          %s1308 = scalar_lea.hbm %s13, %s1307
          %s1310 = sshll.u32 %s1300, 4
          %s1311 = int_to_ptr.vmem [resolvable:$true] %s1310
          %1313 = dma.vmem_to_hbm [thread:$0]  %s1311, 128, %s1308, %s1297
        $region76: #{_forward.1} parent=71 // pred_fallthru
          _
      $region72: #{_forward.1} parent=5 // pred_fallthru
        _
      %p1314 = scmp.le.s32.totalorder 2, %s22
      // Predicated region
      $region77: #{_forward.1} parent=5 // pred_check
        %p1315 = pneg %p1314
      $region78: #{_forward.1} parent=5 // pred_check_branch
        %1317 = sbr.rel (%p1315) target = $region80
      $region79: #{_forward.1} parent=5 // pred_region
        %s1318 = ssub.s32 %s22, 2
        // Predicated region
        $region81: #{_forward.1} parent=79 // pred_check
          %p1319 = pneg %p329
        $region82: #{_forward.1} parent=79 // pred_check_branch
          %1321 = sbr.rel (%p1319) target = $region84
        $region83: #{_forward.1} parent=79 // pred_region
          %s1322 = sand.u32 %s314, 1
          %s1323 = scalar_lea.sflag [#allocation3], %s1322
          %s1324 = sand.u32 %s314, 1
          %s1325 = smul.addr %s1324, 8
          %s1326 = scalar_lea.vmem [#allocation2], %s1325
          %1327 = dma.done %s1323, 128
        $region84: #{_forward.1} parent=79 // pred_fallthru
          _
      $region80: #{_forward.1} parent=5 // pred_fallthru
        _
    $region6: #{_forward.1} parent=1 // loop_footer
      %s26 = sadd.s32 1, %s22
    $region7: #{_forward.1} parent=1 // loop_footer_branch
      %21 = sbr.rel target = $region3
    $region8: #{_forward.1} parent=1 // loop_exit
      _
    %1328 = vsyncpa [#allocation3], 1
    %s1329 = scalar_lea.sflag [#allocation3], 1
    %1330 = vsyncpa %s1329, 1

</llo_original>
